<compile_context>
chip_gen: v5e
topology: v5e:2x2
jax: 0.10.0
libtpu: 0.0.40
codegen_flags: <defaults>
</compile_context>

<pallas_src>
import jax
import jax.numpy as jnp
from jax.experimental import pallas as pl
from jax.experimental.pallas import tpu as pltpu

_VMEM_SPEC = pl.BlockSpec(memory_space=pltpu.MemorySpace.VMEM)

# SimpleCNN architectural constants.
_C1, _C2, _N1, _N2 = 16, 32, 64, 2


# ------------------------------ fused kernel ------------------------------

def _fused_cnn_kernel(xrep_ref, fslab_ref, wslab_ref, o_ref, mpad_s):
    """Whole SimpleCNN forward for one small batch, fully resident in VMEM.

    xrep_ref : (B, H+2, (W+2)*C1) f32  zero-padded input, replicated across the
               C1 lane group (lane = w*C1 + c).
    fslab_ref: (16, 256) f32  rows 0..8 = conv1 taps tiled across w, row 9 =
               conv1 bias (tiled), row 10 = conv2 bias (tiled across j),
               row 11 = fc1 bias (lanes 0:64), row 12 = fc2 bias (lanes 0:128).
    wslab_ref: (3*L1 + H2*L2 + 64, 256) bf16
               rows [0, 3*L1)       : banded conv2 weights (one block per dh)
               rows [3*L1, +H2*L2)  : fc1 weights scattered to the kernel's
                                      feature-lane layout
               rows [.., +64)       : fc2 weights, N padded to 128 lanes.
    o_ref    : (8, 128) f32  rows [0:B], lanes [0:2] are the logits.
    mpad_s   : (B, H1+2, L1) f32  zero-row-padded pool1 output (conv2 input).
    """
    f32, bf16 = jnp.float32, jnp.bfloat16
    B, HP, WPC = xrep_ref.shape
    H, W = HP - 2, WPC // _C1 - 2
    H1, W1 = H // 2, W // 2
    H2 = H1 // 2
    L1 = W * _C1                    # conv1 / pool1 lane width (256)
    L2 = W1 * _C2                   # conv2 / pool2 lane width (256)
    KF = H2 * L2                    # fc1 contraction width (1024)

    # ---- conv1 (1 -> C1, 3x3, pad 1) + ReLU : VPU, lane-dense -------------
    acc1 = jnp.zeros((B, H, L1), f32)
    for dh in range(3):
        for dw in range(3):
            t = 3 * dh + dw
            tap = xrep_ref[:, dh:dh + H, dw * _C1:dw * _C1 + L1]   # (B,H,L1)
            acc1 = acc1 + tap * fslab_ref[t:t + 1, :L1]
    out1 = jnp.maximum(acc1 + fslab_ref[9:10, :L1], 0.0)           # (B,H,L1)

    # ---- max-pool 2x2 #1 : value-only, no scratch / masked stores ----------
    # H stage: pairwise max of adjacent rows (a strided slice out1[:, 0::2]
    # would be ideal; the unrolled pairwise max is the conservative equivalent
    # and stays entirely in vregs).
    p1h = jnp.concatenate(
        [jnp.maximum(out1[:, 2 * i:2 * i + 1, :], out1[:, 2 * i + 1:2 * i + 2, :])
         for i in range(H1)], axis=1)                              # (B,H1,L1)
    # W stage: lane roll by one channel group; pooled values land at lanes
    # 2*j*C1 + c (odd groups become garbage that gets zero weight in conv2).
    m1 = jnp.maximum(p1h, pltpu.roll(p1h, L1 - _C1, 2))            # (B,H1,L1)

    # Zero only the two border rows (the W-direction padding is folded into
    # the banded conv2 weights), then one aligned interior store.
    mpad_s[:, 0:1, :] = jnp.zeros((B, 1, L1), f32)
    mpad_s[:, H1 + 1:H1 + 2, :] = jnp.zeros((B, 1, L1), f32)
    mpad_s[:, 1:1 + H1, :] = m1

    # ---- conv2 (C1 -> C2, 3x3, pad 1) + ReLU : 3 banded bf16 MXU matmuls ---
    acc2 = jnp.zeros((B * H1, L2), f32)
    for dh in range(3):
        lhs = mpad_s[:, dh:dh + H1, :].reshape(B * H1, L1).astype(bf16)
        acc2 = acc2 + jnp.dot(lhs, wslab_ref[dh * L1:(dh + 1) * L1, :L2],
                              preferred_element_type=f32)
    out2 = jnp.maximum(acc2 + fslab_ref[10:11, :L2], 0.0)          # (B*H1,L2)

    # ---- max-pool 2x2 #2 : same value-only pattern --------------------------
    o3 = out2.reshape(B, H1, L2)
    h2 = jnp.concatenate(
        [jnp.maximum(o3[:, 2 * i:2 * i + 1, :], o3[:, 2 * i + 1:2 * i + 2, :])
         for i in range(H2)], axis=1)                              # (B,H2,L2)
    h2m = jnp.maximum(h2, pltpu.roll(h2, L2 - _C2, 2))             # pooled @ 2*j2*C2+co

    # ---- flatten + fc1 + ReLU + fc2 : bf16 MXU, lane-dense (8,128) output ---
    # Garbage lanes of h2m hit all-zero rows of the scattered fc1 weights.
    feat = jnp.concatenate([h2m[:, i2, :] for i2 in range(H2)], axis=1)  # (B,KF)
    if B < 8:
        feat = jnp.concatenate([feat, jnp.zeros((8 - B, KF), f32)], axis=0)
    r0 = 3 * L1
    y1 = jnp.dot(feat.astype(bf16), wslab_ref[r0:r0 + KF, :_N1],
                 preferred_element_type=f32)                       # (8,64)
    y1 = jnp.maximum(y1 + fslab_ref[11:12, :_N1], 0.0)
    y2 = jnp.dot(y1.astype(bf16), wslab_ref[r0 + KF:r0 + KF + _N1, :128],
                 preferred_element_type=f32)                       # (8,128)
    o_ref[...] = y2 + fslab_ref[12:13, :128]                       # full-tile store


# ------------------------- wrapper / parameter prep -------------------------

def prepare_params(params, height, width):
    """One-time layout plumbing: pack every parameter into two input slabs."""
    H1, W1 = height // 2, width // 2
    H2, W2 = H1 // 2, W1 // 2
    L1 = width * _C1
    L2 = W1 * _C2
    KF = H2 * L2
    LW = max(L1, L2, 128)

    # f32 slab: conv1 taps (tiled across w) + every bias.
    fslab = jnp.zeros((16, LW), jnp.float32)
    fslab = fslab.at[0:9, :L1].set(jnp.tile(params["w1"], (1, width)))
    fslab = fslab.at[9, :L1].set(jnp.tile(params["b1"], width))
    fslab = fslab.at[10, :L2].set(jnp.tile(params["b2"], W1))
    fslab = fslab.at[11, :_N1].set(params["bf1"])
    fslab = fslab.at[12, :_N2].set(params["bf2"])

    # Banded conv2 weights: fold the W-direction taps, the zero padding in W
    # and the (lane = 2*j*C1 + ci) layout of the rolled pool1 output into three
    # (L1, L2) matrices, one per kernel row dh.
    w2 = params["w2"].reshape(3, 3, _C1, _C2)
    wband = jnp.zeros((3, L1, L2), jnp.float32)
    for dw in range(3):
        for j in range(W1):
            jj = j + dw - 1
            if 0 <= jj < W1:
                wband = wband.at[:, 2 * _C1 * jj:2 * _C1 * jj + _C1,
                                 _C2 * j:_C2 * (j + 1)].set(w2[:, dw])
    wband = wband.reshape(3 * L1, L2)

    # fc1 weights scattered from PyTorch's NCHW flatten order to the kernel's
    # feature-lane layout (column i2*L2 + 2*C2*j2 + co); garbage lanes of the
    # rolled pool2 output land on all-zero rows.
    co, i2, j2 = jnp.meshgrid(jnp.arange(_C2), jnp.arange(H2), jnp.arange(W2),
                              indexing="ij")
    src = (co * (H2 * W2) + i2 * W2 + j2).reshape(-1)
    dst = (i2 * L2 + j2 * (2 * _C2) + co).reshape(-1)
    wf1_scat = jnp.zeros((KF, _N1), jnp.float32).at[dst].set(params["wf1"][src])

    wf2_pad = jnp.zeros((_N1, 128), jnp.float32).at[:, :_N2].set(params["wf2"])

    # Single bf16 weight slab (one DMA): [conv2 band | fc1 | fc2].
    wslab = jnp.zeros((3 * L1 + KF + _N1, LW), jnp.float32)
    wslab = wslab.at[0:3 * L1, :L2].set(wband)
    wslab = wslab.at[3 * L1:3 * L1 + KF, :_N1].set(wf1_scat)
    wslab = wslab.at[3 * L1 + KF:, :128].set(wf2_pad)
    return {"fslab": fslab, "wslab": wslab.astype(jnp.bfloat16)}


def simple_cnn_forward(x, prepped):
    """x: (B, H, W) float32.  Mirrors SimpleCNN.forward (x.unsqueeze(1), ...)."""
    B, H, W = x.shape
    assert B <= 8 and H % 4 == 0 and W % 4 == 0
    # Zero-pad and replicate across the C1 lane group (lane = w*C1 + c):
    # pure layout plumbing so the kernel's conv1 is 9 dense lane-wide FMAs.
    xpad = jnp.pad(x, ((0, 0), (1, 1), (1, 1)))
    xrep = jnp.repeat(xpad, _C1, axis=2)                      # (B,H+2,(W+2)*C1)
    out_pad = pl.pallas_call(
        _fused_cnn_kernel,
        out_shape=jax.ShapeDtypeStruct((8, 128), jnp.float32),
        in_specs=[_VMEM_SPEC] * 3,
        out_specs=_VMEM_SPEC,
        scratch_shapes=[pltpu.VMEM((B, H // 2 + 2, W * _C1), jnp.float32)],
    )(xrep, prepped["fslab"], prepped["wslab"])
    return out_pad[:B, :_N2]


# ------------------------------ init / reference ----------------------------

def init_params(key, flatten_dim):
    ks = jax.random.split(key, 8)
    s = 0.1
    # Conv weights are stored HWIO-flattened: rows t = 3*dh + dw (conv1) and
    # (3*dh + dw)*C1 + ci (conv2).  Real PyTorch weights (O, I, kh, kw) should
    # be transposed to (kh, kw, I, O) and reshaped the same way before use.
    w1 = s * jax.random.normal(ks[0], (9, _C1), jnp.float32)
    b1 = s * jax.random.normal(ks[1], (_C1,), jnp.float32)
    w2 = s * jax.random.normal(ks[2], (9 * _C1, _C2), jnp.float32)
    b2 = s * jax.random.normal(ks[3], (_C2,), jnp.float32)
    # fc1 rows follow PyTorch's NCHW flatten order (i.e. fc1.weight.T).
    wf1 = s * jax.random.normal(ks[4], (flatten_dim, _N1), jnp.float32)
    bf1 = s * jax.random.normal(ks[5], (_N1,), jnp.float32)
    wf2 = s * jax.random.normal(ks[6], (_N1, _N2), jnp.float32)
    bf2 = s * jax.random.normal(ks[7], (_N2,), jnp.float32)
    return dict(w1=w1, b1=b1, w2=w2, b2=b2, wf1=wf1, bf1=bf1, wf2=wf2, bf2=bf2)


def reference_forward(x, params):
    """Pure-JAX reference with the same bf16 cast points as the kernel."""
    B, H, W = x.shape
    H1, W1, H2, W2 = H // 2, W // 2, H // 4, W // 4
    bf16, f32 = jnp.bfloat16, jnp.float32
    w1 = params["w1"].reshape(3, 3, _C1)
    xpad = jnp.pad(x, ((0, 0), (1, 1), (1, 1)))[..., None]
    a1 = jnp.zeros((B, H, W, _C1), f32)
    for dh in range(3):
        for dw in range(3):
            a1 = a1 + xpad[:, dh:dh + H, dw:dw + W, :] * w1[dh, dw]
    a1 = jax.nn.relu(a1 + params["b1"])
    p1 = jnp.max(a1.reshape(B, H1, 2, W1, 2, _C1), axis=(2, 4))
    w2 = params["w2"].reshape(3, 3, _C1, _C2).astype(bf16)
    p1p = jnp.pad(p1, ((0, 0), (1, 1), (1, 1), (0, 0))).astype(bf16)
    a2 = jnp.zeros((B, H1, W1, _C2), f32)
    for dh in range(3):
        for dw in range(3):
            a2 = a2 + jnp.einsum("bhwc,cd->bhwd",
                                 p1p[:, dh:dh + H1, dw:dw + W1, :], w2[dh, dw],
                                 preferred_element_type=f32)
    a2 = jax.nn.relu(a2 + params["b2"])
    p2 = jnp.max(a2.reshape(B, H2, 2, W2, 2, _C2), axis=(2, 4))
    feat = jnp.transpose(p2, (0, 3, 1, 2)).reshape(B, -1)     # NCHW flatten
    y1 = jax.nn.relu(jnp.dot(feat.astype(bf16), params["wf1"].astype(bf16),
                             preferred_element_type=f32) + params["bf1"])
    return jnp.dot(y1.astype(bf16), params["wf2"].astype(bf16),
                   preferred_element_type=f32) + params["bf2"]


if __name__ == "__main__":
    key = jax.random.PRNGKey(0)
    k_x, k_p = jax.random.split(key)

    B, H, W = 2, 16, 16
    flatten_dim = _C2 * (H // 4) * (W // 4)          # 512

    x = jax.random.normal(k_x, (B, H, W), jnp.float32)
    params = init_params(k_p, flatten_dim)
    prepped = prepare_params(params, H, W)           # one-time layout plumbing

    out = jax.jit(simple_cnn_forward)(x, prepped)
    out = jax.block_until_ready(out)
    assert out.shape == (B, _N2) and out.dtype == jnp.float32

    ref = reference_forward(x, params)
    assert jnp.allclose(out, ref, rtol=2e-2, atol=2e-2), (out, ref)
    print("KERNEL_OK")
</pallas_src>

<mosaic_0001>
module attributes {stable_mosaic.version = 11 : i64} {
  func.func @_fused_cnn_kernel(%arg0: memref<2x18x288xf32, #tpu.memory_space<vmem>>, %arg1: memref<16x256xf32, #tpu.memory_space<vmem>>, %arg2: memref<1856x256xbf16, #tpu.memory_space<vmem>>, %arg3: memref<8x128xf32, #tpu.memory_space<vmem>>, %arg4: memref<2x10x256xf32, #tpu.memory_space<vmem>>) attributes {dimension_semantics = [], scalar_prefetch = 0 : i64, scratch_operands = 1 : i64, tpu.core_type = #tpu.core_type<tc>} {
    %cst = arith.constant 0.000000e+00 : f32
    %0 = vector.broadcast %cst : f32 to vector<2x16x256xf32>
    %c0 = arith.constant 0 : index
    %c0_0 = arith.constant 0 : index
    %c0_1 = arith.constant 0 : index
    %1 = vector.load %arg0[%c0, %c0_0, %c0_1] : memref<2x18x288xf32, #tpu.memory_space<vmem>>, vector<2x16x256xf32>
    %c0_2 = arith.constant 0 : index
    %c0_3 = arith.constant 0 : index
    %2 = vector.load %arg1[%c0_2, %c0_3] : memref<16x256xf32, #tpu.memory_space<vmem>>, vector<1x256xf32>
    %3 = vector.shape_cast %2 : vector<1x256xf32> to vector<1x1x256xf32>
    %4 = vector.broadcast %3 : vector<1x1x256xf32> to vector<2x16x256xf32>
    %5 = arith.mulf %1, %4 : vector<2x16x256xf32>
    %6 = arith.addf %0, %5 : vector<2x16x256xf32>
    %c0_4 = arith.constant 0 : index
    %c0_5 = arith.constant 0 : index
    %c16 = arith.constant 16 : index
    %7 = vector.load %arg0[%c0_4, %c0_5, %c16] : memref<2x18x288xf32, #tpu.memory_space<vmem>>, vector<2x16x256xf32>
    %c1 = arith.constant 1 : index
    %c0_6 = arith.constant 0 : index
    %8 = vector.load %arg1[%c1, %c0_6] : memref<16x256xf32, #tpu.memory_space<vmem>>, vector<1x256xf32>
    %9 = vector.shape_cast %8 : vector<1x256xf32> to vector<1x1x256xf32>
    %10 = vector.broadcast %9 : vector<1x1x256xf32> to vector<2x16x256xf32>
    %11 = arith.mulf %7, %10 : vector<2x16x256xf32>
    %12 = arith.addf %6, %11 : vector<2x16x256xf32>
    %c0_7 = arith.constant 0 : index
    %c0_8 = arith.constant 0 : index
    %c32 = arith.constant 32 : index
    %13 = vector.load %arg0[%c0_7, %c0_8, %c32] : memref<2x18x288xf32, #tpu.memory_space<vmem>>, vector<2x16x256xf32>
    %c2 = arith.constant 2 : index
    %c0_9 = arith.constant 0 : index
    %14 = vector.load %arg1[%c2, %c0_9] : memref<16x256xf32, #tpu.memory_space<vmem>>, vector<1x256xf32>
    %15 = vector.shape_cast %14 : vector<1x256xf32> to vector<1x1x256xf32>
    %16 = vector.broadcast %15 : vector<1x1x256xf32> to vector<2x16x256xf32>
    %17 = arith.mulf %13, %16 : vector<2x16x256xf32>
    %18 = arith.addf %12, %17 : vector<2x16x256xf32>
    %c0_10 = arith.constant 0 : index
    %c1_11 = arith.constant 1 : index
    %c0_12 = arith.constant 0 : index
    %19 = vector.load %arg0[%c0_10, %c1_11, %c0_12] : memref<2x18x288xf32, #tpu.memory_space<vmem>>, vector<2x16x256xf32>
    %c3 = arith.constant 3 : index
    %c0_13 = arith.constant 0 : index
    %20 = vector.load %arg1[%c3, %c0_13] : memref<16x256xf32, #tpu.memory_space<vmem>>, vector<1x256xf32>
    %21 = vector.shape_cast %20 : vector<1x256xf32> to vector<1x1x256xf32>
    %22 = vector.broadcast %21 : vector<1x1x256xf32> to vector<2x16x256xf32>
    %23 = arith.mulf %19, %22 : vector<2x16x256xf32>
    %24 = arith.addf %18, %23 : vector<2x16x256xf32>
    %c0_14 = arith.constant 0 : index
    %c1_15 = arith.constant 1 : index
    %c16_16 = arith.constant 16 : index
    %25 = vector.load %arg0[%c0_14, %c1_15, %c16_16] : memref<2x18x288xf32, #tpu.memory_space<vmem>>, vector<2x16x256xf32>
    %c4 = arith.constant 4 : index
    %c0_17 = arith.constant 0 : index
    %26 = vector.load %arg1[%c4, %c0_17] : memref<16x256xf32, #tpu.memory_space<vmem>>, vector<1x256xf32>
    %27 = vector.shape_cast %26 : vector<1x256xf32> to vector<1x1x256xf32>
    %28 = vector.broadcast %27 : vector<1x1x256xf32> to vector<2x16x256xf32>
    %29 = arith.mulf %25, %28 : vector<2x16x256xf32>
    %30 = arith.addf %24, %29 : vector<2x16x256xf32>
    %c0_18 = arith.constant 0 : index
    %c1_19 = arith.constant 1 : index
    %c32_20 = arith.constant 32 : index
    %31 = vector.load %arg0[%c0_18, %c1_19, %c32_20] : memref<2x18x288xf32, #tpu.memory_space<vmem>>, vector<2x16x256xf32>
    %c5 = arith.constant 5 : index
    %c0_21 = arith.constant 0 : index
    %32 = vector.load %arg1[%c5, %c0_21] : memref<16x256xf32, #tpu.memory_space<vmem>>, vector<1x256xf32>
    %33 = vector.shape_cast %32 : vector<1x256xf32> to vector<1x1x256xf32>
    %34 = vector.broadcast %33 : vector<1x1x256xf32> to vector<2x16x256xf32>
    %35 = arith.mulf %31, %34 : vector<2x16x256xf32>
    %36 = arith.addf %30, %35 : vector<2x16x256xf32>
    %c0_22 = arith.constant 0 : index
    %c2_23 = arith.constant 2 : index
    %c0_24 = arith.constant 0 : index
    %37 = vector.load %arg0[%c0_22, %c2_23, %c0_24] : memref<2x18x288xf32, #tpu.memory_space<vmem>>, vector<2x16x256xf32>
    %c6 = arith.constant 6 : index
    %c0_25 = arith.constant 0 : index
    %38 = vector.load %arg1[%c6, %c0_25] : memref<16x256xf32, #tpu.memory_space<vmem>>, vector<1x256xf32>
    %39 = vector.shape_cast %38 : vector<1x256xf32> to vector<1x1x256xf32>
    %40 = vector.broadcast %39 : vector<1x1x256xf32> to vector<2x16x256xf32>
    %41 = arith.mulf %37, %40 : vector<2x16x256xf32>
    %42 = arith.addf %36, %41 : vector<2x16x256xf32>
    %c0_26 = arith.constant 0 : index
    %c2_27 = arith.constant 2 : index
    %c16_28 = arith.constant 16 : index
    %43 = vector.load %arg0[%c0_26, %c2_27, %c16_28] : memref<2x18x288xf32, #tpu.memory_space<vmem>>, vector<2x16x256xf32>
    %c7 = arith.constant 7 : index
    %c0_29 = arith.constant 0 : index
    %44 = vector.load %arg1[%c7, %c0_29] : memref<16x256xf32, #tpu.memory_space<vmem>>, vector<1x256xf32>
    %45 = vector.shape_cast %44 : vector<1x256xf32> to vector<1x1x256xf32>
    %46 = vector.broadcast %45 : vector<1x1x256xf32> to vector<2x16x256xf32>
    %47 = arith.mulf %43, %46 : vector<2x16x256xf32>
    %48 = arith.addf %42, %47 : vector<2x16x256xf32>
    %c0_30 = arith.constant 0 : index
    %c2_31 = arith.constant 2 : index
    %c32_32 = arith.constant 32 : index
    %49 = vector.load %arg0[%c0_30, %c2_31, %c32_32] : memref<2x18x288xf32, #tpu.memory_space<vmem>>, vector<2x16x256xf32>
    %c8 = arith.constant 8 : index
    %c0_33 = arith.constant 0 : index
    %50 = vector.load %arg1[%c8, %c0_33] : memref<16x256xf32, #tpu.memory_space<vmem>>, vector<1x256xf32>
    %51 = vector.shape_cast %50 : vector<1x256xf32> to vector<1x1x256xf32>
    %52 = vector.broadcast %51 : vector<1x1x256xf32> to vector<2x16x256xf32>
    %53 = arith.mulf %49, %52 : vector<2x16x256xf32>
    %54 = arith.addf %48, %53 : vector<2x16x256xf32>
    %c9 = arith.constant 9 : index
    %c0_34 = arith.constant 0 : index
    %55 = vector.load %arg1[%c9, %c0_34] : memref<16x256xf32, #tpu.memory_space<vmem>>, vector<1x256xf32>
    %56 = vector.shape_cast %55 : vector<1x256xf32> to vector<1x1x256xf32>
    %57 = vector.broadcast %56 : vector<1x1x256xf32> to vector<2x16x256xf32>
    %58 = arith.addf %54, %57 : vector<2x16x256xf32>
    %cst_35 = arith.constant 0.000000e+00 : f32
    %59 = vector.broadcast %cst_35 : f32 to vector<2x16x256xf32>
    %60 = arith.maximumf %58, %59 : vector<2x16x256xf32>
    %61 = vector.extract_strided_slice %60 {offsets = [0, 0, 0], sizes = [2, 1, 256], strides = [1, 1, 1]} : vector<2x16x256xf32> to vector<2x1x256xf32>
    %62 = vector.extract_strided_slice %60 {offsets = [0, 1, 0], sizes = [2, 1, 256], strides = [1, 1, 1]} : vector<2x16x256xf32> to vector<2x1x256xf32>
    %63 = arith.maximumf %61, %62 : vector<2x1x256xf32>
    %64 = vector.extract_strided_slice %60 {offsets = [0, 2, 0], sizes = [2, 1, 256], strides = [1, 1, 1]} : vector<2x16x256xf32> to vector<2x1x256xf32>
    %65 = vector.extract_strided_slice %60 {offsets = [0, 3, 0], sizes = [2, 1, 256], strides = [1, 1, 1]} : vector<2x16x256xf32> to vector<2x1x256xf32>
    %66 = arith.maximumf %64, %65 : vector<2x1x256xf32>
    %67 = vector.extract_strided_slice %60 {offsets = [0, 4, 0], sizes = [2, 1, 256], strides = [1, 1, 1]} : vector<2x16x256xf32> to vector<2x1x256xf32>
    %68 = vector.extract_strided_slice %60 {offsets = [0, 5, 0], sizes = [2, 1, 256], strides = [1, 1, 1]} : vector<2x16x256xf32> to vector<2x1x256xf32>
    %69 = arith.maximumf %67, %68 : vector<2x1x256xf32>
    %70 = vector.extract_strided_slice %60 {offsets = [0, 6, 0], sizes = [2, 1, 256], strides = [1, 1, 1]} : vector<2x16x256xf32> to vector<2x1x256xf32>
    %71 = vector.extract_strided_slice %60 {offsets = [0, 7, 0], sizes = [2, 1, 256], strides = [1, 1, 1]} : vector<2x16x256xf32> to vector<2x1x256xf32>
    %72 = arith.maximumf %70, %71 : vector<2x1x256xf32>
    %73 = vector.extract_strided_slice %60 {offsets = [0, 8, 0], sizes = [2, 1, 256], strides = [1, 1, 1]} : vector<2x16x256xf32> to vector<2x1x256xf32>
    %74 = vector.extract_strided_slice %60 {offsets = [0, 9, 0], sizes = [2, 1, 256], strides = [1, 1, 1]} : vector<2x16x256xf32> to vector<2x1x256xf32>
    %75 = arith.maximumf %73, %74 : vector<2x1x256xf32>
    %76 = vector.extract_strided_slice %60 {offsets = [0, 10, 0], sizes = [2, 1, 256], strides = [1, 1, 1]} : vector<2x16x256xf32> to vector<2x1x256xf32>
    %77 = vector.extract_strided_slice %60 {offsets = [0, 11, 0], sizes = [2, 1, 256], strides = [1, 1, 1]} : vector<2x16x256xf32> to vector<2x1x256xf32>
    %78 = arith.maximumf %76, %77 : vector<2x1x256xf32>
    %79 = vector.extract_strided_slice %60 {offsets = [0, 12, 0], sizes = [2, 1, 256], strides = [1, 1, 1]} : vector<2x16x256xf32> to vector<2x1x256xf32>
    %80 = vector.extract_strided_slice %60 {offsets = [0, 13, 0], sizes = [2, 1, 256], strides = [1, 1, 1]} : vector<2x16x256xf32> to vector<2x1x256xf32>
    %81 = arith.maximumf %79, %80 : vector<2x1x256xf32>
    %82 = vector.extract_strided_slice %60 {offsets = [0, 14, 0], sizes = [2, 1, 256], strides = [1, 1, 1]} : vector<2x16x256xf32> to vector<2x1x256xf32>
    %83 = vector.extract_strided_slice %60 {offsets = [0, 15, 0], sizes = [2, 1, 256], strides = [1, 1, 1]} : vector<2x16x256xf32> to vector<2x1x256xf32>
    %84 = arith.maximumf %82, %83 : vector<2x1x256xf32>
    %85 = tpu.concatenate %63, %66, %69, %72, %75, %78, %81, %84 in 1 : vector<2x1x256xf32>, vector<2x1x256xf32>, vector<2x1x256xf32>, vector<2x1x256xf32>, vector<2x1x256xf32>, vector<2x1x256xf32>, vector<2x1x256xf32>, vector<2x1x256xf32> -> vector<2x8x256xf32>
    %c240_i32 = arith.constant 240 : i32
    %86 = tpu.dynamic_rotate %85 by %c240_i32 dim 2 : vector<2x8x256xf32>, i32 -> vector<2x8x256xf32>
    %87 = arith.maximumf %85, %86 : vector<2x8x256xf32>
    %cst_36 = arith.constant 0.000000e+00 : f32
    %88 = vector.broadcast %cst_36 : f32 to vector<2x1x256xf32>
    %c0_37 = arith.constant 0 : index
    %c0_38 = arith.constant 0 : index
    %c0_39 = arith.constant 0 : index
    %89 = vector.load %arg4[%c0_37, %c0_38, %c0_39] : memref<2x10x256xf32, #tpu.memory_space<vmem>>, vector<2x1x256xf32>
    tpu.vector_store %arg4[%c0_37, %c0_38, %c0_39], %88 {strides = array<i32>} : memref<2x10x256xf32, #tpu.memory_space<vmem>>, vector<2x1x256xf32>,
    %cst_40 = arith.constant 0.000000e+00 : f32
    %90 = vector.broadcast %cst_40 : f32 to vector<2x1x256xf32>
    %c0_41 = arith.constant 0 : index
    %c9_42 = arith.constant 9 : index
    %c0_43 = arith.constant 0 : index
    %91 = vector.load %arg4[%c0_41, %c9_42, %c0_43] : memref<2x10x256xf32, #tpu.memory_space<vmem>>, vector<2x1x256xf32>
    tpu.vector_store %arg4[%c0_41, %c9_42, %c0_43], %90 {strides = array<i32>} : memref<2x10x256xf32, #tpu.memory_space<vmem>>, vector<2x1x256xf32>,
    %c0_44 = arith.constant 0 : index
    %c1_45 = arith.constant 1 : index
    %c0_46 = arith.constant 0 : index
    %92 = vector.load %arg4[%c0_44, %c1_45, %c0_46] : memref<2x10x256xf32, #tpu.memory_space<vmem>>, vector<2x8x256xf32>
    tpu.vector_store %arg4[%c0_44, %c1_45, %c0_46], %87 {strides = array<i32>} : memref<2x10x256xf32, #tpu.memory_space<vmem>>, vector<2x8x256xf32>,
    %cst_47 = arith.constant 0.000000e+00 : f32
    %93 = vector.broadcast %cst_47 : f32 to vector<16x256xf32>
    %c0_48 = arith.constant 0 : index
    %c0_49 = arith.constant 0 : index
    %c0_50 = arith.constant 0 : index
    %94 = vector.load %arg4[%c0_48, %c0_49, %c0_50] : memref<2x10x256xf32, #tpu.memory_space<vmem>>, vector<2x8x256xf32>
    %95 = vector.shape_cast %94 : vector<2x8x256xf32> to vector<16x256xf32>
    %96 = arith.truncf %95 : vector<16x256xf32> to vector<16x256xbf16>
    %c0_51 = arith.constant 0 : index
    %c0_52 = arith.constant 0 : index
    %97 = vector.load %arg2[%c0_51, %c0_52] : memref<1856x256xbf16, #tpu.memory_space<vmem>>, vector<256x256xbf16>
    %cst_53 = arith.constant dense<0.000000e+00> : vector<16x256xf32>
    %98 = tpu.matmul %96, %97, %cst_53 {dimension_numbers = #tpu.dot_dimension_numbers<[1], [0], [0], [1], [0, 0, 1, 1], [], []>} : vector<16x256xbf16>, vector<256x256xbf16>, vector<16x256xf32> -> vector<16x256xf32>
    %99 = arith.addf %93, %98 : vector<16x256xf32>
    %c0_54 = arith.constant 0 : index
    %c1_55 = arith.constant 1 : index
    %c0_56 = arith.constant 0 : index
    %100 = vector.load %arg4[%c0_54, %c1_55, %c0_56] : memref<2x10x256xf32, #tpu.memory_space<vmem>>, vector<2x8x256xf32>
    %101 = vector.shape_cast %100 : vector<2x8x256xf32> to vector<16x256xf32>
    %102 = arith.truncf %101 : vector<16x256xf32> to vector<16x256xbf16>
    %c256 = arith.constant 256 : index
    %c0_57 = arith.constant 0 : index
    %103 = vector.load %arg2[%c256, %c0_57] : memref<1856x256xbf16, #tpu.memory_space<vmem>>, vector<256x256xbf16>
    %cst_58 = arith.constant dense<0.000000e+00> : vector<16x256xf32>
    %104 = tpu.matmul %102, %103, %cst_58 {dimension_numbers = #tpu.dot_dimension_numbers<[1], [0], [0], [1], [0, 0, 1, 1], [], []>} : vector<16x256xbf16>, vector<256x256xbf16>, vector<16x256xf32> -> vector<16x256xf32>
    %105 = arith.addf %99, %104 : vector<16x256xf32>
    %c0_59 = arith.constant 0 : index
    %c2_60 = arith.constant 2 : index
    %c0_61 = arith.constant 0 : index
    %106 = vector.load %arg4[%c0_59, %c2_60, %c0_61] : memref<2x10x256xf32, #tpu.memory_space<vmem>>, vector<2x8x256xf32>
    %107 = vector.shape_cast %106 : vector<2x8x256xf32> to vector<16x256xf32>
    %108 = arith.truncf %107 : vector<16x256xf32> to vector<16x256xbf16>
    %c512 = arith.constant 512 : index
    %c0_62 = arith.constant 0 : index
    %109 = vector.load %arg2[%c512, %c0_62] : memref<1856x256xbf16, #tpu.memory_space<vmem>>, vector<256x256xbf16>
    %cst_63 = arith.constant dense<0.000000e+00> : vector<16x256xf32>
    %110 = tpu.matmul %108, %109, %cst_63 {dimension_numbers = #tpu.dot_dimension_numbers<[1], [0], [0], [1], [0, 0, 1, 1], [], []>} : vector<16x256xbf16>, vector<256x256xbf16>, vector<16x256xf32> -> vector<16x256xf32>
    %111 = arith.addf %105, %110 : vector<16x256xf32>
    %c10 = arith.constant 10 : index
    %c0_64 = arith.constant 0 : index
    %112 = vector.load %arg1[%c10, %c0_64] : memref<16x256xf32, #tpu.memory_space<vmem>>, vector<1x256xf32>
    %113 = vector.broadcast %112 : vector<1x256xf32> to vector<16x256xf32>
    %114 = arith.addf %111, %113 : vector<16x256xf32>
    %cst_65 = arith.constant 0.000000e+00 : f32
    %115 = vector.broadcast %cst_65 : f32 to vector<16x256xf32>
    %116 = arith.maximumf %114, %115 : vector<16x256xf32>
    %117 = vector.shape_cast %116 : vector<16x256xf32> to vector<2x8x256xf32>
    %118 = vector.extract_strided_slice %117 {offsets = [0, 0, 0], sizes = [2, 1, 256], strides = [1, 1, 1]} : vector<2x8x256xf32> to vector<2x1x256xf32>
    %119 = vector.extract_strided_slice %117 {offsets = [0, 1, 0], sizes = [2, 1, 256], strides = [1, 1, 1]} : vector<2x8x256xf32> to vector<2x1x256xf32>
    %120 = arith.maximumf %118, %119 : vector<2x1x256xf32>
    %121 = vector.extract_strided_slice %117 {offsets = [0, 2, 0], sizes = [2, 1, 256], strides = [1, 1, 1]} : vector<2x8x256xf32> to vector<2x1x256xf32>
    %122 = vector.extract_strided_slice %117 {offsets = [0, 3, 0], sizes = [2, 1, 256], strides = [1, 1, 1]} : vector<2x8x256xf32> to vector<2x1x256xf32>
    %123 = arith.maximumf %121, %122 : vector<2x1x256xf32>
    %124 = vector.extract_strided_slice %117 {offsets = [0, 4, 0], sizes = [2, 1, 256], strides = [1, 1, 1]} : vector<2x8x256xf32> to vector<2x1x256xf32>
    %125 = vector.extract_strided_slice %117 {offsets = [0, 5, 0], sizes = [2, 1, 256], strides = [1, 1, 1]} : vector<2x8x256xf32> to vector<2x1x256xf32>
    %126 = arith.maximumf %124, %125 : vector<2x1x256xf32>
    %127 = vector.extract_strided_slice %117 {offsets = [0, 6, 0], sizes = [2, 1, 256], strides = [1, 1, 1]} : vector<2x8x256xf32> to vector<2x1x256xf32>
    %128 = vector.extract_strided_slice %117 {offsets = [0, 7, 0], sizes = [2, 1, 256], strides = [1, 1, 1]} : vector<2x8x256xf32> to vector<2x1x256xf32>
    %129 = arith.maximumf %127, %128 : vector<2x1x256xf32>
    %130 = tpu.concatenate %120, %123, %126, %129 in 1 : vector<2x1x256xf32>, vector<2x1x256xf32>, vector<2x1x256xf32>, vector<2x1x256xf32> -> vector<2x4x256xf32>
    %c224_i32 = arith.constant 224 : i32
    %131 = tpu.dynamic_rotate %130 by %c224_i32 dim 2 : vector<2x4x256xf32>, i32 -> vector<2x4x256xf32>
    %132 = arith.maximumf %130, %131 : vector<2x4x256xf32>
    %133 = vector.extract_strided_slice %132 {offsets = [0, 0, 0], sizes = [2, 1, 256], strides = [1, 1, 1]} : vector<2x4x256xf32> to vector<2x1x256xf32>
    %134 = vector.shape_cast %133 : vector<2x1x256xf32> to vector<2x256xf32>
    %135 = vector.extract_strided_slice %132 {offsets = [0, 1, 0], sizes = [2, 1, 256], strides = [1, 1, 1]} : vector<2x4x256xf32> to vector<2x1x256xf32>
    %136 = vector.shape_cast %135 : vector<2x1x256xf32> to vector<2x256xf32>
    %137 = vector.extract_strided_slice %132 {offsets = [0, 2, 0], sizes = [2, 1, 256], strides = [1, 1, 1]} : vector<2x4x256xf32> to vector<2x1x256xf32>
    %138 = vector.shape_cast %137 : vector<2x1x256xf32> to vector<2x256xf32>
    %139 = vector.extract_strided_slice %132 {offsets = [0, 3, 0], sizes = [2, 1, 256], strides = [1, 1, 1]} : vector<2x4x256xf32> to vector<2x1x256xf32>
    %140 = vector.shape_cast %139 : vector<2x1x256xf32> to vector<2x256xf32>
    %141 = tpu.concatenate %134, %136, %138, %140 in 1 : vector<2x256xf32>, vector<2x256xf32>, vector<2x256xf32>, vector<2x256xf32> -> vector<2x1024xf32>
    %cst_66 = arith.constant 0.000000e+00 : f32
    %142 = vector.broadcast %cst_66 : f32 to vector<6x1024xf32>
    %143 = tpu.concatenate %141, %142 in 0 : vector<2x1024xf32>, vector<6x1024xf32> -> vector<8x1024xf32>
    %144 = arith.truncf %143 : vector<8x1024xf32> to vector<8x1024xbf16>
    %c768 = arith.constant 768 : index
    %c0_67 = arith.constant 0 : index
    %145 = vector.load %arg2[%c768, %c0_67] : memref<1856x256xbf16, #tpu.memory_space<vmem>>, vector<1024x64xbf16>
    %cst_68 = arith.constant dense<0.000000e+00> : vector<8x64xf32>
    %146 = tpu.matmul %144, %145, %cst_68 {dimension_numbers = #tpu.dot_dimension_numbers<[1], [0], [0], [1], [0, 0, 1, 1], [], []>} : vector<8x1024xbf16>, vector<1024x64xbf16>, vector<8x64xf32> -> vector<8x64xf32>
    %c11 = arith.constant 11 : index
    %c0_69 = arith.constant 0 : index
    %147 = vector.load %arg1[%c11, %c0_69] : memref<16x256xf32, #tpu.memory_space<vmem>>, vector<1x64xf32>
    %148 = vector.broadcast %147 : vector<1x64xf32> to vector<8x64xf32>
    %149 = arith.addf %146, %148 : vector<8x64xf32>
    %cst_70 = arith.constant 0.000000e+00 : f32
    %150 = vector.broadcast %cst_70 : f32 to vector<8x64xf32>
    %151 = arith.maximumf %149, %150 : vector<8x64xf32>
    %152 = arith.truncf %151 : vector<8x64xf32> to vector<8x64xbf16>
    %c1792 = arith.constant 1792 : index
    %c0_71 = arith.constant 0 : index
    %153 = vector.load %arg2[%c1792, %c0_71] : memref<1856x256xbf16, #tpu.memory_space<vmem>>, vector<64x128xbf16>
    %cst_72 = arith.constant dense<0.000000e+00> : vector<8x128xf32>
    %154 = tpu.matmul %152, %153, %cst_72 {dimension_numbers = #tpu.dot_dimension_numbers<[1], [0], [0], [1], [0, 0, 1, 1], [], []>} : vector<8x64xbf16>, vector<64x128xbf16>, vector<8x128xf32> -> vector<8x128xf32>
    %c12 = arith.constant 12 : index
    %c0_73 = arith.constant 0 : index
    %155 = vector.load %arg1[%c12, %c0_73] : memref<16x256xf32, #tpu.memory_space<vmem>>, vector<1x128xf32>
    %156 = vector.broadcast %155 : vector<1x128xf32> to vector<8x128xf32>
    %157 = arith.addf %154, %156 : vector<8x128xf32>
    %c0_74 = arith.constant 0 : index
    %c0_75 = arith.constant 0 : index
    %158 = vector.load %arg3[%c0_74, %c0_75] : memref<8x128xf32, #tpu.memory_space<vmem>>, vector<8x128xf32>
    tpu.vector_store %arg3[%c0_74, %c0_75], %157 {strides = array<i32>} : memref<8x128xf32, #tpu.memory_space<vmem>>, vector<8x128xf32>,
    return
  }
}

</mosaic_0001>

<llo_original>
// kernel: simple_cnn_forward.1
$region0: #{simple_cnn_forward.1}
  #allocation0 [shape = 'u32[]', space=smem, size = 0x4, offset = 0x4, fixed_abs, tag = 'smem constant byte address 0x4 - core index']
  #allocation1 [shape = 'u32[72,128]{1,0:T(1,128)}', space=vmem, size = 0x9000, scoped, tag = 'internal scratch']
  #allocation2 [shape = 'f32[2,10,256]{2,1,0:T(8,128)}', space=vmem, size = 0x8000, scoped, tag = 'scratch operand']
  %s0 = inlined_call_operand.vmem [shape: f32[2,18,288], index: 0, kind: input, shape index: {}]
  %s1 = inlined_call_operand.vmem [shape: f32[16,256], index: 1, kind: input, shape index: {}]
  %s2 = inlined_call_operand.vmem [shape: bf16[1856,256], index: 2, kind: input, shape index: {}]
  %s3 = inlined_call_operand.vmem [shape: f32[8,128], index: 3, kind: output, shape index: {}]
  %s4 = sld [smem:[#allocation0]]
  $region22: #{simple_cnn_forward.1} parent=0
    _
  %s6 = ssub.s32 1, %s4
  %s7 = scalar_select 0, %s6, %s4
  // Predicated region
  $region2: #{simple_cnn_forward.1} parent=0 // pred_check
    _
  $region3: #{simple_cnn_forward.1} parent=0 // pred_check_branch
    %9 = sbr.rel (0) target = $region5
  $region4: #{simple_cnn_forward.1} parent=0 // pred_region
    _
  $region5: #{simple_cnn_forward.1} parent=0 // pred_fallthru
    _
  // Predicated region
  $region6: #{simple_cnn_forward.1} parent=0 // pred_check
    _
  $region7: #{simple_cnn_forward.1} parent=0 // pred_check_branch
    %11 = sbr.rel (0) target = $region9
  $region8: #{simple_cnn_forward.1} parent=0 // pred_region
    _
  $region9: #{simple_cnn_forward.1} parent=0 // pred_fallthru
    _
  // Predicated region
  $region10: #{simple_cnn_forward.1} parent=0 // pred_check
    _
  $region11: #{simple_cnn_forward.1} parent=0 // pred_check_branch
    %13 = sbr.rel (0) target = $region13
  $region12: #{simple_cnn_forward.1} parent=0 // pred_region
    _
  $region13: #{simple_cnn_forward.1} parent=0 // pred_fallthru
    _
  %v15 = vld [vmem:[%s0] sm:$0xff]
  %v16 = vld [vmem:[%s0 + $0x8] sm:$0xff]
  %v17 = vld [vmem:[%s0 + $0x18] sm:$0xff]
  %v18 = vld [vmem:[%s0 + $0x20] sm:$0xff]
  %v19 = vld [vmem:[%s0 + $0x48] sm:$0xff]
  %v20 = vld [vmem:[%s0 + $0x50] sm:$0xff]
  %v21 = vld [vmem:[%s0 + $0x60] sm:$0xff]
  %v22 = vld [vmem:[%s0 + $0x68] sm:$0xff]
  %v23 = vld [vmem:[%s1] ss:$8 sm:$0x3]
  %v25 = vperm.slane %v23, 0
  %v26 = vperm.slane %v23, 1
  %v29 = vmul.f32 %v15, %v25
  %v30 = vmul.f32 %v16, %v26
  %v31 = vmul.f32 %v17, %v25
  %v32 = vmul.f32 %v18, %v26
  %v33 = vmul.f32 %v19, %v25
  %v34 = vmul.f32 %v20, %v26
  %v35 = vmul.f32 %v21, %v25
  %v36 = vmul.f32 %v22, %v26
  %v37 = vadd.f32 %v29, 0.0
  %v38 = vadd.f32 %v30, 0.0
  %v39 = vadd.f32 %v31, 0.0
  %v40 = vadd.f32 %v32, 0.0
  %v41 = vadd.f32 %v33, 0.0
  %v42 = vadd.f32 %v34, 0.0
  %v43 = vadd.f32 %v35, 0.0
  %v44 = vadd.f32 %v36, 0.0
  %v45 = vld [vmem:[%s0 + $0x10] sm:$0xff]
  %v46 = vld [vmem:[%s0 + $0x28] sm:$0xff]
  %v47 = vld [vmem:[%s0 + $0x58] sm:$0xff]
  %v48 = vld [vmem:[%s0 + $0x70] sm:$0xff]
  %s49 = scalar_lea.vmem %s1, 1
  %v50 = vld [vmem:[%s49] ss:$8 sm:$0x3]
  %v52 = vperm.slane %v50, 0
  %v53 = vperm.slane %v50, 1
  %54 = vrot.lane.b32.xlu0 %v52, 16
  %v55 = vpop.permute.xlu0 %54
  %56 = vrot.lane.b32.xlu0 %v53, 16
  %v57 = vpop.permute.xlu0 %56
  %vm58 = vcmask 130048
  %v59 = vsel %vm58, %v55, %v57
  %v63 = vmul.f32 %v15, %v55
  %v64 = vmul.f32 %v16, %v59
  %v65 = vmul.f32 %v45, %v57
  %v66 = vmul.f32 %v17, %v55
  %v67 = vmul.f32 %v18, %v59
  %v68 = vmul.f32 %v46, %v57
  %v69 = vmul.f32 %v19, %v55
  %v70 = vmul.f32 %v20, %v59
  %v71 = vmul.f32 %v47, %v57
  %v72 = vmul.f32 %v21, %v55
  %v73 = vmul.f32 %v22, %v59
  %v74 = vmul.f32 %v48, %v57
  %87 = vrot.lane.b32.xlu0 %v63, 112
  %v88 = vpop.permute.xlu0 %87
  %89 = vrot.lane.b32.xlu0 %v64, 112
  %v90 = vpop.permute.xlu0 %89
  %91 = vrot.lane.b32.xlu0 %v65, 112
  %v92 = vpop.permute.xlu0 %91
  %93 = vrot.lane.b32.xlu0 %v66, 112
  %v94 = vpop.permute.xlu0 %93
  %95 = vrot.lane.b32.xlu0 %v67, 112
  %v96 = vpop.permute.xlu0 %95
  %97 = vrot.lane.b32.xlu0 %v68, 112
  %v98 = vpop.permute.xlu0 %97
  %99 = vrot.lane.b32.xlu0 %v69, 112
  %v100 = vpop.permute.xlu0 %99
  %101 = vrot.lane.b32.xlu0 %v70, 112
  %v102 = vpop.permute.xlu0 %101
  %103 = vrot.lane.b32.xlu0 %v71, 112
  %v104 = vpop.permute.xlu0 %103
  %105 = vrot.lane.b32.xlu0 %v72, 112
  %v106 = vpop.permute.xlu0 %105
  %107 = vrot.lane.b32.xlu0 %v73, 112
  %v108 = vpop.permute.xlu0 %107
  %109 = vrot.lane.b32.xlu0 %v74, 112
  %v110 = vpop.permute.xlu0 %109
  %vm111 = vcmask 916480
  %v112 = vsel %vm111, %v88, %v90
  %v113 = vsel %vm111, %v90, %v92
  %v114 = vsel %vm111, %v94, %v96
  %v115 = vsel %vm111, %v96, %v98
  %v116 = vsel %vm111, %v100, %v102
  %v117 = vsel %vm111, %v102, %v104
  %v118 = vsel %vm111, %v106, %v108
  %v119 = vsel %vm111, %v108, %v110
  %v128 = vadd.f32 %v37, %v112
  %v129 = vadd.f32 %v38, %v113
  %v130 = vadd.f32 %v39, %v114
  %v131 = vadd.f32 %v40, %v115
  %v132 = vadd.f32 %v41, %v116
  %v133 = vadd.f32 %v42, %v117
  %v134 = vadd.f32 %v43, %v118
  %v135 = vadd.f32 %v44, %v119
  %s136 = scalar_lea.vmem %s1, 2
  %v137 = vld [vmem:[%s136] ss:$8 sm:$0x3]
  %v139 = vperm.slane %v137, 0
  %v140 = vperm.slane %v137, 1
  %141 = vrot.lane.b32.xlu0 %v139, 32
  %v142 = vpop.permute.xlu0 %141
  %143 = vrot.lane.b32.xlu0 %v140, 32
  %v144 = vpop.permute.xlu0 %143
  %vm145 = vcmask 261120
  %v146 = vsel %vm145, %v142, %v144
  %v150 = vmul.f32 %v15, %v142
  %v151 = vmul.f32 %v16, %v146
  %v152 = vmul.f32 %v45, %v144
  %v153 = vmul.f32 %v17, %v142
  %v154 = vmul.f32 %v18, %v146
  %v155 = vmul.f32 %v46, %v144
  %v156 = vmul.f32 %v19, %v142
  %v157 = vmul.f32 %v20, %v146
  %v158 = vmul.f32 %v47, %v144
  %v159 = vmul.f32 %v21, %v142
  %v160 = vmul.f32 %v22, %v146
  %v161 = vmul.f32 %v48, %v144
  %174 = vrot.lane.b32.xlu0 %v150, 96
  %v175 = vpop.permute.xlu0 %174
  %176 = vrot.lane.b32.xlu0 %v151, 96
  %v177 = vpop.permute.xlu0 %176
  %178 = vrot.lane.b32.xlu0 %v152, 96
  %v179 = vpop.permute.xlu0 %178
  %180 = vrot.lane.b32.xlu0 %v153, 96
  %v181 = vpop.permute.xlu0 %180
  %182 = vrot.lane.b32.xlu0 %v154, 96
  %v183 = vpop.permute.xlu0 %182
  %184 = vrot.lane.b32.xlu0 %v155, 96
  %v185 = vpop.permute.xlu0 %184
  %186 = vrot.lane.b32.xlu0 %v156, 96
  %v187 = vpop.permute.xlu0 %186
  %188 = vrot.lane.b32.xlu0 %v157, 96
  %v189 = vpop.permute.xlu0 %188
  %190 = vrot.lane.b32.xlu0 %v158, 96
  %v191 = vpop.permute.xlu0 %190
  %192 = vrot.lane.b32.xlu0 %v159, 96
  %v193 = vpop.permute.xlu0 %192
  %194 = vrot.lane.b32.xlu0 %v160, 96
  %v195 = vpop.permute.xlu0 %194
  %196 = vrot.lane.b32.xlu0 %v161, 96
  %v197 = vpop.permute.xlu0 %196
  %vm198 = vcmask 785408
  %v199 = vsel %vm198, %v175, %v177
  %v200 = vsel %vm198, %v177, %v179
  %v201 = vsel %vm198, %v181, %v183
  %v202 = vsel %vm198, %v183, %v185
  %v203 = vsel %vm198, %v187, %v189
  %v204 = vsel %vm198, %v189, %v191
  %v205 = vsel %vm198, %v193, %v195
  %v206 = vsel %vm198, %v195, %v197
  %v215 = vadd.f32 %v128, %v199
  %v216 = vadd.f32 %v129, %v200
  %v217 = vadd.f32 %v130, %v201
  %v218 = vadd.f32 %v131, %v202
  %v219 = vadd.f32 %v132, %v203
  %v220 = vadd.f32 %v133, %v204
  %v221 = vadd.f32 %v134, %v205
  %v222 = vadd.f32 %v135, %v206
  %v223 = vld [vmem:[%s0] sm:$0xfe]
  %v224 = vld [vmem:[%s0 + $0x8] sm:$0xfe]
  %v225 = vld [vmem:[%s0 + $0x30] sm:$0x1]
  %v226 = vld [vmem:[%s0 + $0x38] sm:$0x1]
  %v227 = vld [vmem:[%s0 + $0x48] sm:$0xfe]
  %v228 = vld [vmem:[%s0 + $0x50] sm:$0xfe]
  %v229 = vld [vmem:[%s0 + $0x78] sm:$0x1]
  %v230 = vld [vmem:[%s0 + $0x80] sm:$0x1]
  %s231 = scalar_lea.vmem %s1, 3
  %v232 = vld [vmem:[%s231] ss:$8 sm:$0x3]
  %v234 = vperm.slane %v232, 0
  %v235 = vperm.slane %v232, 1
  %v238 = vmul.f32 %v223, %v234
  %v239 = vmul.f32 %v224, %v235
  %v240 = vmul.f32 %v17, %v234
  %v241 = vmul.f32 %v18, %v235
  %v242 = vmul.f32 %v225, %v234
  %v243 = vmul.f32 %v226, %v235
  %v244 = vmul.f32 %v227, %v234
  %v245 = vmul.f32 %v228, %v235
  %v246 = vmul.f32 %v21, %v234
  %v247 = vmul.f32 %v22, %v235
  %v248 = vmul.f32 %v229, %v234
  %v249 = vmul.f32 %v230, %v235
  %vm262 = vcmask 1046528
  %v263 = vrot.slane %v238, 1
  %v264 = vrot.slane %v240, 1
  %v265 = vsel %vm262, %v263, %v264
  %v266 = vrot.slane %v239, 1
  %v267 = vrot.slane %v241, 1
  %v268 = vsel %vm262, %v266, %v267
  %v269 = vrot.slane %v242, 1
  %v270 = vsel %vm262, %v264, %v269
  %v271 = vrot.slane %v243, 1
  %v272 = vsel %vm262, %v267, %v271
  %v273 = vrot.slane %v244, 1
  %v274 = vrot.slane %v246, 1
  %v275 = vsel %vm262, %v273, %v274
  %v276 = vrot.slane %v245, 1
  %v277 = vrot.slane %v247, 1
  %v278 = vsel %vm262, %v276, %v277
  %v279 = vrot.slane %v248, 1
  %v280 = vsel %vm262, %v274, %v279
  %v281 = vrot.slane %v249, 1
  %v282 = vsel %vm262, %v277, %v281
  %v291 = vadd.f32 %v215, %v265
  %v292 = vadd.f32 %v216, %v268
  %v293 = vadd.f32 %v217, %v270
  %v294 = vadd.f32 %v218, %v272
  %v295 = vadd.f32 %v219, %v275
  %v296 = vadd.f32 %v220, %v278
  %v297 = vadd.f32 %v221, %v280
  %v298 = vadd.f32 %v222, %v282
  %v299 = vld [vmem:[%s0 + $0x10] sm:$0xfe]
  %v300 = vld [vmem:[%s0 + $0x40] sm:$0x1]
  %v301 = vld [vmem:[%s0 + $0x58] sm:$0xfe]
  %v302 = vld [vmem:[%s0 + $0x88] sm:$0x1]
  %s303 = scalar_lea.vmem %s1, 4
  %v304 = vld [vmem:[%s303] ss:$8 sm:$0x3]
  %v306 = vperm.slane %v304, 0
  %v307 = vperm.slane %v304, 1
  %308 = vrot.lane.b32.xlu0 %v306, 16
  %v309 = vpop.permute.xlu0 %308
  %310 = vrot.lane.b32.xlu0 %v307, 16
  %v311 = vpop.permute.xlu0 %310
  %v312 = vsel %vm58, %v309, %v311
  %v316 = vmul.f32 %v223, %v309
  %v317 = vmul.f32 %v224, %v312
  %v318 = vmul.f32 %v299, %v311
  %v319 = vmul.f32 %v17, %v309
  %v320 = vmul.f32 %v18, %v312
  %v321 = vmul.f32 %v46, %v311
  %v322 = vmul.f32 %v225, %v309
  %v323 = vmul.f32 %v226, %v312
  %v324 = vmul.f32 %v300, %v311
  %v325 = vmul.f32 %v227, %v309
  %v326 = vmul.f32 %v228, %v312
  %v327 = vmul.f32 %v301, %v311
  %v328 = vmul.f32 %v21, %v309
  %v329 = vmul.f32 %v22, %v312
  %v330 = vmul.f32 %v48, %v311
  %v331 = vmul.f32 %v229, %v309
  %v332 = vmul.f32 %v230, %v312
  %v333 = vmul.f32 %v302, %v311
  %v352 = vrot.slane %v316, 1
  %v353 = vrot.slane %v319, 1
  %v354 = vsel %vm262, %v352, %v353
  %v355 = vrot.slane %v317, 1
  %v356 = vrot.slane %v320, 1
  %v357 = vsel %vm262, %v355, %v356
  %v358 = vrot.slane %v318, 1
  %v359 = vrot.slane %v321, 1
  %v360 = vsel %vm262, %v358, %v359
  %v361 = vrot.slane %v322, 1
  %v362 = vsel %vm262, %v353, %v361
  %v363 = vrot.slane %v323, 1
  %v364 = vsel %vm262, %v356, %v363
  %v365 = vrot.slane %v324, 1
  %v366 = vsel %vm262, %v359, %v365
  %v367 = vrot.slane %v325, 1
  %v368 = vrot.slane %v328, 1
  %v369 = vsel %vm262, %v367, %v368
  %v370 = vrot.slane %v326, 1
  %v371 = vrot.slane %v329, 1
  %v372 = vsel %vm262, %v370, %v371
  %v373 = vrot.slane %v327, 1
  %v374 = vrot.slane %v330, 1
  %v375 = vsel %vm262, %v373, %v374
  %v376 = vrot.slane %v331, 1
  %v377 = vsel %vm262, %v368, %v376
  %v378 = vrot.slane %v332, 1
  %v379 = vsel %vm262, %v371, %v378
  %v380 = vrot.slane %v333, 1
  %v381 = vsel %vm262, %v374, %v380
  %382 = vrot.lane.b32.xlu0 %v354, 112
  %v383 = vpop.permute.xlu0 %382
  %384 = vrot.lane.b32.xlu0 %v357, 112
  %v385 = vpop.permute.xlu0 %384
  %386 = vrot.lane.b32.xlu0 %v360, 112
  %v387 = vpop.permute.xlu0 %386
  %388 = vrot.lane.b32.xlu0 %v362, 112
  %v389 = vpop.permute.xlu0 %388
  %390 = vrot.lane.b32.xlu0 %v364, 112
  %v391 = vpop.permute.xlu0 %390
  %392 = vrot.lane.b32.xlu0 %v366, 112
  %v393 = vpop.permute.xlu0 %392
  %394 = vrot.lane.b32.xlu0 %v369, 112
  %v395 = vpop.permute.xlu0 %394
  %396 = vrot.lane.b32.xlu0 %v372, 112
  %v397 = vpop.permute.xlu0 %396
  %398 = vrot.lane.b32.xlu0 %v375, 112
  %v399 = vpop.permute.xlu0 %398
  %400 = vrot.lane.b32.xlu0 %v377, 112
  %v401 = vpop.permute.xlu0 %400
  %402 = vrot.lane.b32.xlu0 %v379, 112
  %v403 = vpop.permute.xlu0 %402
  %404 = vrot.lane.b32.xlu0 %v381, 112
  %v405 = vpop.permute.xlu0 %404
  %v406 = vsel %vm111, %v383, %v385
  %v407 = vsel %vm111, %v385, %v387
  %v408 = vsel %vm111, %v389, %v391
  %v409 = vsel %vm111, %v391, %v393
  %v410 = vsel %vm111, %v395, %v397
  %v411 = vsel %vm111, %v397, %v399
  %v412 = vsel %vm111, %v401, %v403
  %v413 = vsel %vm111, %v403, %v405
  %v422 = vadd.f32 %v291, %v406
  %v423 = vadd.f32 %v292, %v407
  %v424 = vadd.f32 %v293, %v408
  %v425 = vadd.f32 %v294, %v409
  %v426 = vadd.f32 %v295, %v410
  %v427 = vadd.f32 %v296, %v411
  %v428 = vadd.f32 %v297, %v412
  %v429 = vadd.f32 %v298, %v413
  %s430 = scalar_lea.vmem %s1, 5
  %v431 = vld [vmem:[%s430] ss:$8 sm:$0x3]
  %v433 = vperm.slane %v431, 0
  %v434 = vperm.slane %v431, 1
  %435 = vrot.lane.b32.xlu0 %v433, 32
  %v436 = vpop.permute.xlu0 %435
  %437 = vrot.lane.b32.xlu0 %v434, 32
  %v438 = vpop.permute.xlu0 %437
  %v439 = vsel %vm145, %v436, %v438
  %v443 = vmul.f32 %v223, %v436
  %v444 = vmul.f32 %v224, %v439
  %v445 = vmul.f32 %v299, %v438
  %v446 = vmul.f32 %v17, %v436
  %v447 = vmul.f32 %v18, %v439
  %v448 = vmul.f32 %v46, %v438
  %v449 = vmul.f32 %v225, %v436
  %v450 = vmul.f32 %v226, %v439
  %v451 = vmul.f32 %v300, %v438
  %v452 = vmul.f32 %v227, %v436
  %v453 = vmul.f32 %v228, %v439
  %v454 = vmul.f32 %v301, %v438
  %v455 = vmul.f32 %v21, %v436
  %v456 = vmul.f32 %v22, %v439
  %v457 = vmul.f32 %v48, %v438
  %v458 = vmul.f32 %v229, %v436
  %v459 = vmul.f32 %v230, %v439
  %v460 = vmul.f32 %v302, %v438
  %v479 = vrot.slane %v443, 1
  %v480 = vrot.slane %v446, 1
  %v481 = vsel %vm262, %v479, %v480
  %v482 = vrot.slane %v444, 1
  %v483 = vrot.slane %v447, 1
  %v484 = vsel %vm262, %v482, %v483
  %v485 = vrot.slane %v445, 1
  %v486 = vrot.slane %v448, 1
  %v487 = vsel %vm262, %v485, %v486
  %v488 = vrot.slane %v449, 1
  %v489 = vsel %vm262, %v480, %v488
  %v490 = vrot.slane %v450, 1
  %v491 = vsel %vm262, %v483, %v490
  %v492 = vrot.slane %v451, 1
  %v493 = vsel %vm262, %v486, %v492
  %v494 = vrot.slane %v452, 1
  %v495 = vrot.slane %v455, 1
  %v496 = vsel %vm262, %v494, %v495
  %v497 = vrot.slane %v453, 1
  %v498 = vrot.slane %v456, 1
  %v499 = vsel %vm262, %v497, %v498
  %v500 = vrot.slane %v454, 1
  %v501 = vrot.slane %v457, 1
  %v502 = vsel %vm262, %v500, %v501
  %v503 = vrot.slane %v458, 1
  %v504 = vsel %vm262, %v495, %v503
  %v505 = vrot.slane %v459, 1
  %v506 = vsel %vm262, %v498, %v505
  %v507 = vrot.slane %v460, 1
  %v508 = vsel %vm262, %v501, %v507
  %509 = vrot.lane.b32.xlu0 %v481, 96
  %v510 = vpop.permute.xlu0 %509
  %511 = vrot.lane.b32.xlu0 %v484, 96
  %v512 = vpop.permute.xlu0 %511
  %513 = vrot.lane.b32.xlu0 %v487, 96
  %v514 = vpop.permute.xlu0 %513
  %515 = vrot.lane.b32.xlu0 %v489, 96
  %v516 = vpop.permute.xlu0 %515
  %517 = vrot.lane.b32.xlu0 %v491, 96
  %v518 = vpop.permute.xlu0 %517
  %519 = vrot.lane.b32.xlu0 %v493, 96
  %v520 = vpop.permute.xlu0 %519
  %521 = vrot.lane.b32.xlu0 %v496, 96
  %v522 = vpop.permute.xlu0 %521
  %523 = vrot.lane.b32.xlu0 %v499, 96
  %v524 = vpop.permute.xlu0 %523
  %525 = vrot.lane.b32.xlu0 %v502, 96
  %v526 = vpop.permute.xlu0 %525
  %527 = vrot.lane.b32.xlu0 %v504, 96
  %v528 = vpop.permute.xlu0 %527
  %529 = vrot.lane.b32.xlu0 %v506, 96
  %v530 = vpop.permute.xlu0 %529
  %531 = vrot.lane.b32.xlu0 %v508, 96
  %v532 = vpop.permute.xlu0 %531
  %v533 = vsel %vm198, %v510, %v512
  %v534 = vsel %vm198, %v512, %v514
  %v535 = vsel %vm198, %v516, %v518
  %v536 = vsel %vm198, %v518, %v520
  %v537 = vsel %vm198, %v522, %v524
  %v538 = vsel %vm198, %v524, %v526
  %v539 = vsel %vm198, %v528, %v530
  %v540 = vsel %vm198, %v530, %v532
  %v549 = vadd.f32 %v422, %v533
  %v550 = vadd.f32 %v423, %v534
  %v551 = vadd.f32 %v424, %v535
  %v552 = vadd.f32 %v425, %v536
  %v553 = vadd.f32 %v426, %v537
  %v554 = vadd.f32 %v427, %v538
  %v555 = vadd.f32 %v428, %v539
  %v556 = vadd.f32 %v429, %v540
  %v557 = vld [vmem:[%s0] sm:$0xfc]
  %v558 = vld [vmem:[%s0 + $0x8] sm:$0xfc]
  %v559 = vld [vmem:[%s0 + $0x30] sm:$0x3]
  %v560 = vld [vmem:[%s0 + $0x38] sm:$0x3]
  %v561 = vld [vmem:[%s0 + $0x48] sm:$0xfc]
  %v562 = vld [vmem:[%s0 + $0x50] sm:$0xfc]
  %v563 = vld [vmem:[%s0 + $0x78] sm:$0x3]
  %v564 = vld [vmem:[%s0 + $0x80] sm:$0x3]
  %s565 = scalar_lea.vmem %s1, 6
  %v566 = vld [vmem:[%s565] ss:$8 sm:$0x3]
  %v568 = vperm.slane %v566, 0
  %v569 = vperm.slane %v566, 1
  %v572 = vmul.f32 %v557, %v568
  %v573 = vmul.f32 %v558, %v569
  %v574 = vmul.f32 %v17, %v568
  %v575 = vmul.f32 %v18, %v569
  %v576 = vmul.f32 %v559, %v568
  %v577 = vmul.f32 %v560, %v569
  %v578 = vmul.f32 %v561, %v568
  %v579 = vmul.f32 %v562, %v569
  %v580 = vmul.f32 %v21, %v568
  %v581 = vmul.f32 %v22, %v569
  %v582 = vmul.f32 %v563, %v568
  %v583 = vmul.f32 %v564, %v569
  %vm596 = vcmask 1045504
  %v597 = vrot.slane %v572, 2
  %v598 = vrot.slane %v574, 2
  %v599 = vsel %vm596, %v597, %v598
  %v600 = vrot.slane %v573, 2
  %v601 = vrot.slane %v575, 2
  %v602 = vsel %vm596, %v600, %v601
  %v603 = vrot.slane %v576, 2
  %v604 = vsel %vm596, %v598, %v603
  %v605 = vrot.slane %v577, 2
  %v606 = vsel %vm596, %v601, %v605
  %v607 = vrot.slane %v578, 2
  %v608 = vrot.slane %v580, 2
  %v609 = vsel %vm596, %v607, %v608
  %v610 = vrot.slane %v579, 2
  %v611 = vrot.slane %v581, 2
  %v612 = vsel %vm596, %v610, %v611
  %v613 = vrot.slane %v582, 2
  %v614 = vsel %vm596, %v608, %v613
  %v615 = vrot.slane %v583, 2
  %v616 = vsel %vm596, %v611, %v615
  %v625 = vadd.f32 %v549, %v599
  %v626 = vadd.f32 %v550, %v602
  %v627 = vadd.f32 %v551, %v604
  %v628 = vadd.f32 %v552, %v606
  %v629 = vadd.f32 %v553, %v609
  %v630 = vadd.f32 %v554, %v612
  %v631 = vadd.f32 %v555, %v614
  %v632 = vadd.f32 %v556, %v616
  %v633 = vld [vmem:[%s0 + $0x10] sm:$0xfc]
  %v634 = vld [vmem:[%s0 + $0x40] sm:$0x3]
  %v635 = vld [vmem:[%s0 + $0x58] sm:$0xfc]
  %v636 = vld [vmem:[%s0 + $0x88] sm:$0x3]
  %s637 = scalar_lea.vmem %s1, 7
  %v638 = vld [vmem:[%s637] ss:$8 sm:$0x3]
  %v640 = vperm.slane %v638, 0
  %v641 = vperm.slane %v638, 1
  %642 = vrot.lane.b32.xlu0 %v640, 16
  %v643 = vpop.permute.xlu0 %642
  %644 = vrot.lane.b32.xlu0 %v641, 16
  %v645 = vpop.permute.xlu0 %644
  %v646 = vsel %vm58, %v643, %v645
  %v650 = vmul.f32 %v557, %v643
  %v651 = vmul.f32 %v558, %v646
  %v652 = vmul.f32 %v633, %v645
  %v653 = vmul.f32 %v17, %v643
  %v654 = vmul.f32 %v18, %v646
  %v655 = vmul.f32 %v46, %v645
  %v656 = vmul.f32 %v559, %v643
  %v657 = vmul.f32 %v560, %v646
  %v658 = vmul.f32 %v634, %v645
  %v659 = vmul.f32 %v561, %v643
  %v660 = vmul.f32 %v562, %v646
  %v661 = vmul.f32 %v635, %v645
  %v662 = vmul.f32 %v21, %v643
  %v663 = vmul.f32 %v22, %v646
  %v664 = vmul.f32 %v48, %v645
  %v665 = vmul.f32 %v563, %v643
  %v666 = vmul.f32 %v564, %v646
  %v667 = vmul.f32 %v636, %v645
  %v686 = vrot.slane %v650, 2
  %v687 = vrot.slane %v653, 2
  %v688 = vsel %vm596, %v686, %v687
  %v689 = vrot.slane %v651, 2
  %v690 = vrot.slane %v654, 2
  %v691 = vsel %vm596, %v689, %v690
  %v692 = vrot.slane %v652, 2
  %v693 = vrot.slane %v655, 2
  %v694 = vsel %vm596, %v692, %v693
  %v695 = vrot.slane %v656, 2
  %v696 = vsel %vm596, %v687, %v695
  %v697 = vrot.slane %v657, 2
  %v698 = vsel %vm596, %v690, %v697
  %v699 = vrot.slane %v658, 2
  %v700 = vsel %vm596, %v693, %v699
  %v701 = vrot.slane %v659, 2
  %v702 = vrot.slane %v662, 2
  %v703 = vsel %vm596, %v701, %v702
  %v704 = vrot.slane %v660, 2
  %v705 = vrot.slane %v663, 2
  %v706 = vsel %vm596, %v704, %v705
  %v707 = vrot.slane %v661, 2
  %v708 = vrot.slane %v664, 2
  %v709 = vsel %vm596, %v707, %v708
  %v710 = vrot.slane %v665, 2
  %v711 = vsel %vm596, %v702, %v710
  %v712 = vrot.slane %v666, 2
  %v713 = vsel %vm596, %v705, %v712
  %v714 = vrot.slane %v667, 2
  %v715 = vsel %vm596, %v708, %v714
  %716 = vrot.lane.b32.xlu0 %v688, 112
  %v717 = vpop.permute.xlu0 %716
  %718 = vrot.lane.b32.xlu0 %v691, 112
  %v719 = vpop.permute.xlu0 %718
  %720 = vrot.lane.b32.xlu0 %v694, 112
  %v721 = vpop.permute.xlu0 %720
  %722 = vrot.lane.b32.xlu0 %v696, 112
  %v723 = vpop.permute.xlu0 %722
  %724 = vrot.lane.b32.xlu0 %v698, 112
  %v725 = vpop.permute.xlu0 %724
  %726 = vrot.lane.b32.xlu0 %v700, 112
  %v727 = vpop.permute.xlu0 %726
  %728 = vrot.lane.b32.xlu0 %v703, 112
  %v729 = vpop.permute.xlu0 %728
  %730 = vrot.lane.b32.xlu0 %v706, 112
  %v731 = vpop.permute.xlu0 %730
  %732 = vrot.lane.b32.xlu0 %v709, 112
  %v733 = vpop.permute.xlu0 %732
  %734 = vrot.lane.b32.xlu0 %v711, 112
  %v735 = vpop.permute.xlu0 %734
  %736 = vrot.lane.b32.xlu0 %v713, 112
  %v737 = vpop.permute.xlu0 %736
  %738 = vrot.lane.b32.xlu0 %v715, 112
  %v739 = vpop.permute.xlu0 %738
  %v740 = vsel %vm111, %v717, %v719
  %v741 = vsel %vm111, %v719, %v721
  %v742 = vsel %vm111, %v723, %v725
  %v743 = vsel %vm111, %v725, %v727
  %v744 = vsel %vm111, %v729, %v731
  %v745 = vsel %vm111, %v731, %v733
  %v746 = vsel %vm111, %v735, %v737
  %v747 = vsel %vm111, %v737, %v739
  %v756 = vadd.f32 %v625, %v740
  %v757 = vadd.f32 %v626, %v741
  %v758 = vadd.f32 %v627, %v742
  %v759 = vadd.f32 %v628, %v743
  %v760 = vadd.f32 %v629, %v744
  %v761 = vadd.f32 %v630, %v745
  %v762 = vadd.f32 %v631, %v746
  %v763 = vadd.f32 %v632, %v747
  %s764 = scalar_lea.vmem %s1, 16
  %v765 = vld [vmem:[%s764] ss:$8 sm:$0x3]
  %v767 = vperm.slane %v765, 0
  %v768 = vperm.slane %v765, 1
  %769 = vrot.lane.b32.xlu0 %v767, 32
  %v770 = vpop.permute.xlu0 %769
  %771 = vrot.lane.b32.xlu0 %v768, 32
  %v772 = vpop.permute.xlu0 %771
  %v773 = vsel %vm145, %v770, %v772
  %v777 = vmul.f32 %v557, %v770
  %v778 = vmul.f32 %v558, %v773
  %v779 = vmul.f32 %v633, %v772
  %v780 = vmul.f32 %v17, %v770
  %v781 = vmul.f32 %v18, %v773
  %v782 = vmul.f32 %v46, %v772
  %v783 = vmul.f32 %v559, %v770
  %v784 = vmul.f32 %v560, %v773
  %v785 = vmul.f32 %v634, %v772
  %v786 = vmul.f32 %v561, %v770
  %v787 = vmul.f32 %v562, %v773
  %v788 = vmul.f32 %v635, %v772
  %v789 = vmul.f32 %v21, %v770
  %v790 = vmul.f32 %v22, %v773
  %v791 = vmul.f32 %v48, %v772
  %v792 = vmul.f32 %v563, %v770
  %v793 = vmul.f32 %v564, %v773
  %v794 = vmul.f32 %v636, %v772
  %v813 = vrot.slane %v777, 2
  %v814 = vrot.slane %v780, 2
  %v815 = vsel %vm596, %v813, %v814
  %v816 = vrot.slane %v778, 2
  %v817 = vrot.slane %v781, 2
  %v818 = vsel %vm596, %v816, %v817
  %v819 = vrot.slane %v779, 2
  %v820 = vrot.slane %v782, 2
  %v821 = vsel %vm596, %v819, %v820
  %v822 = vrot.slane %v783, 2
  %v823 = vsel %vm596, %v814, %v822
  %v824 = vrot.slane %v784, 2
  %v825 = vsel %vm596, %v817, %v824
  %v826 = vrot.slane %v785, 2
  %v827 = vsel %vm596, %v820, %v826
  %v828 = vrot.slane %v786, 2
  %v829 = vrot.slane %v789, 2
  %v830 = vsel %vm596, %v828, %v829
  %v831 = vrot.slane %v787, 2
  %v832 = vrot.slane %v790, 2
  %v833 = vsel %vm596, %v831, %v832
  %v834 = vrot.slane %v788, 2
  %v835 = vrot.slane %v791, 2
  %v836 = vsel %vm596, %v834, %v835
  %v837 = vrot.slane %v792, 2
  %v838 = vsel %vm596, %v829, %v837
  %v839 = vrot.slane %v793, 2
  %v840 = vsel %vm596, %v832, %v839
  %v841 = vrot.slane %v794, 2
  %v842 = vsel %vm596, %v835, %v841
  %843 = vrot.lane.b32.xlu0 %v815, 96
  %v844 = vpop.permute.xlu0 %843
  %845 = vrot.lane.b32.xlu0 %v818, 96
  %v846 = vpop.permute.xlu0 %845
  %847 = vrot.lane.b32.xlu0 %v821, 96
  %v848 = vpop.permute.xlu0 %847
  %849 = vrot.lane.b32.xlu0 %v823, 96
  %v850 = vpop.permute.xlu0 %849
  %851 = vrot.lane.b32.xlu0 %v825, 96
  %v852 = vpop.permute.xlu0 %851
  %853 = vrot.lane.b32.xlu0 %v827, 96
  %v854 = vpop.permute.xlu0 %853
  %855 = vrot.lane.b32.xlu0 %v830, 96
  %v856 = vpop.permute.xlu0 %855
  %857 = vrot.lane.b32.xlu0 %v833, 96
  %v858 = vpop.permute.xlu0 %857
  %859 = vrot.lane.b32.xlu0 %v836, 96
  %v860 = vpop.permute.xlu0 %859
  %861 = vrot.lane.b32.xlu0 %v838, 96
  %v862 = vpop.permute.xlu0 %861
  %863 = vrot.lane.b32.xlu0 %v840, 96
  %v864 = vpop.permute.xlu0 %863
  %865 = vrot.lane.b32.xlu0 %v842, 96
  %v866 = vpop.permute.xlu0 %865
  %v867 = vsel %vm198, %v844, %v846
  %v868 = vsel %vm198, %v846, %v848
  %v869 = vsel %vm198, %v850, %v852
  %v870 = vsel %vm198, %v852, %v854
  %v871 = vsel %vm198, %v856, %v858
  %v872 = vsel %vm198, %v858, %v860
  %v873 = vsel %vm198, %v862, %v864
  %v874 = vsel %vm198, %v864, %v866
  %v883 = vadd.f32 %v756, %v867
  %v884 = vadd.f32 %v757, %v868
  %v885 = vadd.f32 %v758, %v869
  %v886 = vadd.f32 %v759, %v870
  %v887 = vadd.f32 %v760, %v871
  %v888 = vadd.f32 %v761, %v872
  %v889 = vadd.f32 %v762, %v873
  %v890 = vadd.f32 %v763, %v874
  %s891 = scalar_lea.vmem %s1, 17
  %v892 = vld [vmem:[%s891] ss:$8 sm:$0x3]
  %v894 = vperm.slane %v892, 0
  %v895 = vperm.slane %v892, 1
  %v898 = vadd.f32 %v883, %v894
  %v899 = vadd.f32 %v884, %v895
  %v900 = vadd.f32 %v885, %v894
  %v901 = vadd.f32 %v886, %v895
  %v902 = vadd.f32 %v887, %v894
  %v903 = vadd.f32 %v888, %v895
  %v904 = vadd.f32 %v889, %v894
  %v905 = vadd.f32 %v890, %v895
  %v906 = vmax.f32 %v898, 0.0
  %v907 = vmax.f32 %v899, 0.0
  %v908 = vmax.f32 %v900, 0.0
  %v909 = vmax.f32 %v901, 0.0
  %v910 = vmax.f32 %v902, 0.0
  %v911 = vmax.f32 %v903, 0.0
  %v912 = vmax.f32 %v904, 0.0
  %v913 = vmax.f32 %v905, 0.0
  %v918 = vrot.slane %v906, 1
  %v919 = vrot.slane %v907, 1
  %v920 = vrot.slane %v910, 1
  %v921 = vrot.slane %v911, 1
  %v926 = vmax.f32 %v906, %v918
  %v927 = vmax.f32 %v907, %v919
  %v928 = vmax.f32 %v910, %v920
  %v929 = vmax.f32 %v911, %v921
  %v934 = vrot.slane %v908, 1
  %v935 = vrot.slane %v909, 1
  %v936 = vrot.slane %v912, 1
  %v937 = vrot.slane %v913, 1
  %v942 = vmax.f32 %v908, %v934
  %v943 = vmax.f32 %v909, %v935
  %v944 = vmax.f32 %v912, %v936
  %v945 = vmax.f32 %v913, %v937
  %v950 = vrot.slane %v926, 1
  %v951 = vrot.slane %v927, 1
  %v952 = vrot.slane %v928, 1
  %v953 = vrot.slane %v929, 1
  %v958 = vrot.slane %v926, 2
  %v959 = vrot.slane %v927, 2
  %v960 = vrot.slane %v928, 2
  %v961 = vrot.slane %v929, 2
  %v966 = vrot.slane %v926, 3
  %v967 = vrot.slane %v927, 3
  %v968 = vrot.slane %v928, 3
  %v969 = vrot.slane %v929, 3
  %v978 = vrot.slane %v942, 4
  %v979 = vrot.slane %v943, 4
  %v980 = vrot.slane %v944, 4
  %v981 = vrot.slane %v945, 4
  %v986 = vrot.slane %v942, 5
  %v987 = vrot.slane %v943, 5
  %v988 = vrot.slane %v944, 5
  %v989 = vrot.slane %v945, 5
  %v994 = vrot.slane %v942, 6
  %v995 = vrot.slane %v943, 6
  %v996 = vrot.slane %v944, 6
  %v997 = vrot.slane %v945, 6
  %v1002 = vrot.slane %v942, 7
  %v1003 = vrot.slane %v943, 7
  %v1004 = vrot.slane %v944, 7
  %v1005 = vrot.slane %v945, 7
  %vm1010 = vcmask 1040384
  %v1011 = vsel %vm1010, %v926, %v950
  %v1012 = vsel %vm1010, %v927, %v951
  %v1013 = vsel %vm1010, %v928, %v952
  %v1014 = vsel %vm1010, %v929, %v953
  %vm1015 = vcmask 1041408
  %v1016 = vsel %vm1015, %v1011, %v958
  %v1017 = vsel %vm1015, %v1012, %v959
  %v1018 = vsel %vm1015, %v1013, %v960
  %v1019 = vsel %vm1015, %v1014, %v961
  %vm1020 = vcmask 1042432
  %v1021 = vsel %vm1020, %v1016, %v966
  %v1022 = vsel %vm1020, %v1017, %v967
  %v1023 = vsel %vm1020, %v1018, %v968
  %v1024 = vsel %vm1020, %v1019, %v969
  %vm1025 = vcmask 1043456
  %v1026 = vsel %vm1025, %v1021, %v978
  %v1027 = vsel %vm1025, %v1022, %v979
  %v1028 = vsel %vm1025, %v1023, %v980
  %v1029 = vsel %vm1025, %v1024, %v981
  %vm1030 = vcmask 1044480
  %v1031 = vsel %vm1030, %v1026, %v986
  %v1032 = vsel %vm1030, %v1027, %v987
  %v1033 = vsel %vm1030, %v1028, %v988
  %v1034 = vsel %vm1030, %v1029, %v989
  %v1035 = vsel %vm596, %v1031, %v994
  %v1036 = vsel %vm596, %v1032, %v995
  %v1037 = vsel %vm596, %v1033, %v996
  %v1038 = vsel %vm596, %v1034, %v997
  %v1039 = vsel %vm262, %v1035, %v1002
  %v1040 = vsel %vm262, %v1036, %v1003
  %v1041 = vsel %vm262, %v1037, %v1004
  %v1042 = vsel %vm262, %v1038, %v1005
  %1043 = vrot.lane.b32.xlu0 %v1039, 112
  %v1044 = vpop.permute.xlu0 %1043
  %1045 = vrot.lane.b32.xlu0 %v1041, 112
  %v1046 = vpop.permute.xlu0 %1045
  %1047 = vrot.lane.b32.xlu0 %v1040, 112
  %v1048 = vpop.permute.xlu0 %1047
  %1049 = vrot.lane.b32.xlu0 %v1042, 112
  %v1050 = vpop.permute.xlu0 %1049
  %v1051 = vlaneseq
  %v1052 = vand.u32 %v1051, 127
  %vm1053 = vcmp.lt.s32.totalorder %v1052, 112
  %v1054 = vsel %vm1053, %v1044, %v1048
  %v1055 = vsel %vm1053, %v1046, %v1050
  %v1056 = vsel %vm1053, %v1048, %v1044
  %v1057 = vsel %vm1053, %v1050, %v1046
  %v1058 = vmax.f32 %v1039, %v1054
  %v1059 = vmax.f32 %v1040, %v1056
  %v1060 = vmax.f32 %v1041, %v1055
  %v1061 = vmax.f32 %v1042, %v1057
  %v1062 = vlaneseq
  %vm1063 = vcmp.ge.s32.totalorder %v1062, 0
  %vm1064 = vcmp.lt.s32.totalorder %v1062, 256
  %vm1065 = vmand %vm1063, %vm1064
  %1066 = vst.msk [vmem:[#allocation2] ss:$8 sm:$0x3] %vm1065, 0.0
  %1067 = vst.msk [vmem:[#allocation2] ss:$8 sm:$0x0] %vm1065, 0.0
  %s1068 = scalar_lea.vmem [#allocation2], 32
  %1069 = vst.msk [vmem:[%s1068] ss:$8 sm:$0x3] %vm1065, 0.0
  %1070 = vst.msk [vmem:[%s1068] ss:$8 sm:$0x0] %vm1065, 0.0
  %s1071 = scalar_lea.vmem [#allocation2], 17
  %1072 = vst.msk [vmem:[%s1071] ss:$8 sm:$0x3] %vm1065, 0.0
  %1073 = vst.msk [vmem:[%s1071] ss:$8 sm:$0x0] %vm1065, 0.0
  %s1074 = scalar_lea.vmem [#allocation2], 49
  %1075 = vst.msk [vmem:[%s1074] ss:$8 sm:$0x3] %vm1065, 0.0
  %1076 = vst.msk [vmem:[%s1074] ss:$8 sm:$0x0] %vm1065, 0.0
  %v1081 = vrot.slane %v1058, 7
  %v1082 = vrot.slane %v1059, 7
  %v1083 = vrot.slane %v1060, 7
  %v1084 = vrot.slane %v1061, 7
  %1089 = vst [vmem:[#allocation2] sm:$0xfe] %v1081
  %1090 = vst [vmem:[#allocation2 + $0x8] sm:$0xfe] %v1082
  %1091 = vst [vmem:[#allocation2 + $0x10] sm:$0x1] %v1081
  %1092 = vst [vmem:[#allocation2 + $0x18] sm:$0x1] %v1082
  %1093 = vst [vmem:[#allocation2 + $0x20] sm:$0xfe] %v1083
  %1094 = vst [vmem:[#allocation2 + $0x28] sm:$0xfe] %v1084
  %1095 = vst [vmem:[#allocation2 + $0x30] sm:$0x1] %v1083
  %1096 = vst [vmem:[#allocation2 + $0x38] sm:$0x1] %v1084
  %v1097 = vld [vmem:[#allocation2] sm:$0xff]
  %v1098 = vld [vmem:[#allocation2 + $0x8] sm:$0xff]
  %v1099 = vld [vmem:[#allocation2 + $0x20] sm:$0xff]
  %v1100 = vld [vmem:[#allocation2 + $0x28] sm:$0xff]
  %v1101 = vpack.c.bf16 %v1099, %v1097
  %v1102 = vpack.c.bf16 %v1100, %v1098
  %v1103 = vld [vmem:[%s2] sm:$0xff]
  %v1104 = vld [vmem:[%s2 + $0x8] sm:$0xff]
  %v1105 = vld [vmem:[%s2 + $0x10] sm:$0xff]
  %v1106 = vld [vmem:[%s2 + $0x18] sm:$0xff]
  %v1107 = vld [vmem:[%s2 + $0x20] sm:$0xff]
  %v1108 = vld [vmem:[%s2 + $0x28] sm:$0xff]
  %v1109 = vld [vmem:[%s2 + $0x30] sm:$0xff]
  %v1110 = vld [vmem:[%s2 + $0x38] sm:$0xff]
  %v1111 = vld [vmem:[%s2 + $0x40] sm:$0xff]
  %v1112 = vld [vmem:[%s2 + $0x48] sm:$0xff]
  %v1113 = vld [vmem:[%s2 + $0x50] sm:$0xff]
  %v1114 = vld [vmem:[%s2 + $0x58] sm:$0xff]
  %v1115 = vld [vmem:[%s2 + $0x60] sm:$0xff]
  %v1116 = vld [vmem:[%s2 + $0x68] sm:$0xff]
  %v1117 = vld [vmem:[%s2 + $0x70] sm:$0xff]
  %v1118 = vld [vmem:[%s2 + $0x78] sm:$0xff]
  %v1119 = vld [vmem:[%s2 + $0x80] sm:$0xff]
  %v1120 = vld [vmem:[%s2 + $0x88] sm:$0xff]
  %v1121 = vld [vmem:[%s2 + $0x90] sm:$0xff]
  %v1122 = vld [vmem:[%s2 + $0x98] sm:$0xff]
  %v1123 = vld [vmem:[%s2 + $0xa0] sm:$0xff]
  %v1124 = vld [vmem:[%s2 + $0xa8] sm:$0xff]
  %v1125 = vld [vmem:[%s2 + $0xb0] sm:$0xff]
  %v1126 = vld [vmem:[%s2 + $0xb8] sm:$0xff]
  %v1127 = vld [vmem:[%s2 + $0xc0] sm:$0xff]
  %v1128 = vld [vmem:[%s2 + $0xc8] sm:$0xff]
  %v1129 = vld [vmem:[%s2 + $0xd0] sm:$0xff]
  %v1130 = vld [vmem:[%s2 + $0xd8] sm:$0xff]
  %v1131 = vld [vmem:[%s2 + $0xe0] sm:$0xff]
  %v1132 = vld [vmem:[%s2 + $0xe8] sm:$0xff]
  %v1133 = vld [vmem:[%s2 + $0xf0] sm:$0xff]
  %v1134 = vld [vmem:[%s2 + $0xf8] sm:$0xff]
  %v1135 = vld [vmem:[#allocation2] sm:$0xfe]
  %v1136 = vld [vmem:[#allocation2 + $0x8] sm:$0xfe]
  %v1137 = vld [vmem:[#allocation2 + $0x10] sm:$0x1]
  %v1138 = vld [vmem:[#allocation2 + $0x18] sm:$0x1]
  %v1139 = vld [vmem:[#allocation2 + $0x20] sm:$0xfe]
  %v1140 = vld [vmem:[#allocation2 + $0x28] sm:$0xfe]
  %v1141 = vld [vmem:[#allocation2 + $0x30] sm:$0x1]
  %v1142 = vld [vmem:[#allocation2 + $0x38] sm:$0x1]
  %v1151 = vrot.slane %v1135, 1
  %v1152 = vrot.slane %v1137, 1
  %v1153 = vsel %vm262, %v1151, %v1152
  %v1154 = vrot.slane %v1136, 1
  %v1155 = vrot.slane %v1138, 1
  %v1156 = vsel %vm262, %v1154, %v1155
  %v1157 = vrot.slane %v1139, 1
  %v1158 = vrot.slane %v1141, 1
  %v1159 = vsel %vm262, %v1157, %v1158
  %v1160 = vrot.slane %v1140, 1
  %v1161 = vrot.slane %v1142, 1
  %v1162 = vsel %vm262, %v1160, %v1161
  %v1167 = vpack.c.bf16 %v1159, %v1153
  %v1168 = vpack.c.bf16 %v1162, %v1156
  %v1169 = vld [vmem:[%s2 + $0x100] sm:$0xff]
  %v1170 = vld [vmem:[%s2 + $0x108] sm:$0xff]
  %v1171 = vld [vmem:[%s2 + $0x110] sm:$0xff]
  %v1172 = vld [vmem:[%s2 + $0x118] sm:$0xff]
  %v1173 = vld [vmem:[%s2 + $0x120] sm:$0xff]
  %v1174 = vld [vmem:[%s2 + $0x128] sm:$0xff]
  %v1175 = vld [vmem:[%s2 + $0x130] sm:$0xff]
  %v1176 = vld [vmem:[%s2 + $0x138] sm:$0xff]
  %v1177 = vld [vmem:[%s2 + $0x140] sm:$0xff]
  %v1178 = vld [vmem:[%s2 + $0x148] sm:$0xff]
  %v1179 = vld [vmem:[%s2 + $0x150] sm:$0xff]
  %v1180 = vld [vmem:[%s2 + $0x158] sm:$0xff]
  %v1181 = vld [vmem:[%s2 + $0x160] sm:$0xff]
  %v1182 = vld [vmem:[%s2 + $0x168] sm:$0xff]
  %v1183 = vld [vmem:[%s2 + $0x170] sm:$0xff]
  %v1184 = vld [vmem:[%s2 + $0x178] sm:$0xff]
  %v1185 = vld [vmem:[%s2 + $0x180] sm:$0xff]
  %v1186 = vld [vmem:[%s2 + $0x188] sm:$0xff]
  %v1187 = vld [vmem:[%s2 + $0x190] sm:$0xff]
  %v1188 = vld [vmem:[%s2 + $0x198] sm:$0xff]
  %v1189 = vld [vmem:[%s2 + $0x1a0] sm:$0xff]
  %v1190 = vld [vmem:[%s2 + $0x1a8] sm:$0xff]
  %v1191 = vld [vmem:[%s2 + $0x1b0] sm:$0xff]
  %v1192 = vld [vmem:[%s2 + $0x1b8] sm:$0xff]
  %v1193 = vld [vmem:[%s2 + $0x1c0] sm:$0xff]
  %v1194 = vld [vmem:[%s2 + $0x1c8] sm:$0xff]
  %v1195 = vld [vmem:[%s2 + $0x1d0] sm:$0xff]
  %v1196 = vld [vmem:[%s2 + $0x1d8] sm:$0xff]
  %v1197 = vld [vmem:[%s2 + $0x1e0] sm:$0xff]
  %v1198 = vld [vmem:[%s2 + $0x1e8] sm:$0xff]
  %v1199 = vld [vmem:[%s2 + $0x1f0] sm:$0xff]
  %v1200 = vld [vmem:[%s2 + $0x1f8] sm:$0xff]
  %v1233 = vunpack.c.l.b16 %v1169
  %v1234 = vunpack.c.h.b16 %v1169
  %v1235 = vunpack.c.l.b16 %v1170
  %v1236 = vunpack.c.h.b16 %v1170
  %v1237 = vunpack.c.l.b16 %v1171
  %v1238 = vunpack.c.h.b16 %v1171
  %v1239 = vunpack.c.l.b16 %v1172
  %v1240 = vunpack.c.h.b16 %v1172
  %v1241 = vunpack.c.l.b16 %v1173
  %v1242 = vunpack.c.h.b16 %v1173
  %v1243 = vunpack.c.l.b16 %v1174
  %v1244 = vunpack.c.h.b16 %v1174
  %v1245 = vunpack.c.l.b16 %v1175
  %v1246 = vunpack.c.h.b16 %v1175
  %v1247 = vunpack.c.l.b16 %v1176
  %v1248 = vunpack.c.h.b16 %v1176
  %v1249 = vunpack.c.l.b16 %v1177
  %v1250 = vunpack.c.h.b16 %v1177
  %v1251 = vunpack.c.l.b16 %v1178
  %v1252 = vunpack.c.h.b16 %v1178
  %v1253 = vunpack.c.l.b16 %v1179
  %v1254 = vunpack.c.h.b16 %v1179
  %v1255 = vunpack.c.l.b16 %v1180
  %v1256 = vunpack.c.h.b16 %v1180
  %v1257 = vunpack.c.l.b16 %v1181
  %v1258 = vunpack.c.h.b16 %v1181
  %v1259 = vunpack.c.l.b16 %v1182
  %v1260 = vunpack.c.h.b16 %v1182
  %v1261 = vunpack.c.l.b16 %v1183
  %v1262 = vunpack.c.h.b16 %v1183
  %v1263 = vunpack.c.l.b16 %v1184
  %v1264 = vunpack.c.h.b16 %v1184
  %v1265 = vunpack.c.l.b16 %v1185
  %v1266 = vunpack.c.h.b16 %v1185
  %v1267 = vunpack.c.l.b16 %v1186
  %v1268 = vunpack.c.h.b16 %v1186
  %v1269 = vunpack.c.l.b16 %v1187
  %v1270 = vunpack.c.h.b16 %v1187
  %v1271 = vunpack.c.l.b16 %v1188
  %v1272 = vunpack.c.h.b16 %v1188
  %v1273 = vunpack.c.l.b16 %v1189
  %v1274 = vunpack.c.h.b16 %v1189
  %v1275 = vunpack.c.l.b16 %v1190
  %v1276 = vunpack.c.h.b16 %v1190
  %v1277 = vunpack.c.l.b16 %v1191
  %v1278 = vunpack.c.h.b16 %v1191
  %v1279 = vunpack.c.l.b16 %v1192
  %v1280 = vunpack.c.h.b16 %v1192
  %v1281 = vunpack.c.l.b16 %v1193
  %v1282 = vunpack.c.h.b16 %v1193
  %v1283 = vunpack.c.l.b16 %v1194
  %v1284 = vunpack.c.h.b16 %v1194
  %v1285 = vunpack.c.l.b16 %v1195
  %v1286 = vunpack.c.h.b16 %v1195
  %v1287 = vunpack.c.l.b16 %v1196
  %v1288 = vunpack.c.h.b16 %v1196
  %v1289 = vunpack.c.l.b16 %v1197
  %v1290 = vunpack.c.h.b16 %v1197
  %v1291 = vunpack.c.l.b16 %v1198
  %v1292 = vunpack.c.h.b16 %v1198
  %v1293 = vunpack.c.l.b16 %v1199
  %v1294 = vunpack.c.h.b16 %v1199
  %v1295 = vunpack.c.l.b16 %v1200
  %v1296 = vunpack.c.h.b16 %v1200
  %v1297 = vpack.c.b16 %v1235, %v1233
  %v1298 = vpack.c.b16 %v1236, %v1234
  %v1299 = vpack.c.b16 %v1239, %v1237
  %v1300 = vpack.c.b16 %v1240, %v1238
  %v1301 = vpack.c.b16 %v1243, %v1241
  %v1302 = vpack.c.b16 %v1244, %v1242
  %v1303 = vpack.c.b16 %v1247, %v1245
  %v1304 = vpack.c.b16 %v1248, %v1246
  %v1305 = vpack.c.b16 %v1251, %v1249
  %v1306 = vpack.c.b16 %v1252, %v1250
  %v1307 = vpack.c.b16 %v1255, %v1253
  %v1308 = vpack.c.b16 %v1256, %v1254
  %v1309 = vpack.c.b16 %v1259, %v1257
  %v1310 = vpack.c.b16 %v1260, %v1258
  %v1311 = vpack.c.b16 %v1263, %v1261
  %v1312 = vpack.c.b16 %v1264, %v1262
  %v1313 = vpack.c.b16 %v1267, %v1265
  %v1314 = vpack.c.b16 %v1268, %v1266
  %v1315 = vpack.c.b16 %v1271, %v1269
  %v1316 = vpack.c.b16 %v1272, %v1270
  %v1317 = vpack.c.b16 %v1275, %v1273
  %v1318 = vpack.c.b16 %v1276, %v1274
  %v1319 = vpack.c.b16 %v1279, %v1277
  %v1320 = vpack.c.b16 %v1280, %v1278
  %v1321 = vpack.c.b16 %v1283, %v1281
  %v1322 = vpack.c.b16 %v1284, %v1282
  %v1323 = vpack.c.b16 %v1287, %v1285
  %v1324 = vpack.c.b16 %v1288, %v1286
  %v1325 = vpack.c.b16 %v1291, %v1289
  %v1326 = vpack.c.b16 %v1292, %v1290
  %v1327 = vpack.c.b16 %v1295, %v1293
  %v1328 = vpack.c.b16 %v1296, %v1294
  %1361 = vmatpush.bf16.msra.mxu0 %v1311
  %1362 = vmatpush.bf16.msra.mxu0 %v1309
  %1363 = vmatpush.bf16.msra.mxu0 %v1307
  %1364 = vmatpush.bf16.msra.mxu0 %v1305
  %1365 = vmatpush.bf16.msra.mxu0 %v1303
  %1366 = vmatpush.bf16.msra.mxu0 %v1301
  %1367 = vmatpush.bf16.msra.mxu0 %v1299
  %1368 = vmatpush.bf16.msra.mxu0 %v1297
  %1369 = vmatmul.bf16.gmra.mxu0 %v1167
  %v1370 = vpop.f32.mrf.mxu0
  %v1371 = vadd.f32 0.0, %v1370
  %v1372 = vpop.f32.mrf.mxu0
  %v1373 = vadd.f32 0.0, %v1372
  %1374 = vdwg.mxu0
  %1375 = vmatpush.bf16.msra.mxu0 %v1327
  %1376 = vmatpush.bf16.msra.mxu0 %v1325
  %1377 = vmatpush.bf16.msra.mxu0 %v1323
  %1378 = vmatpush.bf16.msra.mxu0 %v1321
  %1379 = vmatpush.bf16.msra.mxu0 %v1319
  %1380 = vmatpush.bf16.msra.mxu0 %v1317
  %1381 = vmatpush.bf16.msra.mxu0 %v1315
  %1382 = vmatpush.bf16.msra.mxu0 %v1313
  %1383 = vmatmul.bf16.gmra.mxu0 %v1168
  %v1384 = vpop.f32.mrf.mxu0
  %v1385 = vadd.f32 %v1371, %v1384
  %v1386 = vpop.f32.mrf.mxu0
  %v1387 = vadd.f32 %v1373, %v1386
  %1388 = vdwg.mxu0
  %1389 = vmatpush.bf16.msra.mxu0 %v1312
  %1390 = vmatpush.bf16.msra.mxu0 %v1310
  %1391 = vmatpush.bf16.msra.mxu0 %v1308
  %1392 = vmatpush.bf16.msra.mxu0 %v1306
  %1393 = vmatpush.bf16.msra.mxu0 %v1304
  %1394 = vmatpush.bf16.msra.mxu0 %v1302
  %1395 = vmatpush.bf16.msra.mxu0 %v1300
  %1396 = vmatpush.bf16.msra.mxu0 %v1298
  %1397 = vmatmul.bf16.gmra.mxu0 %v1167
  %v1398 = vpop.f32.mrf.mxu0
  %v1399 = vadd.f32 0.0, %v1398
  %v1400 = vpop.f32.mrf.mxu0
  %v1401 = vadd.f32 0.0, %v1400
  %1402 = vdwg.mxu0
  %1403 = vmatpush.bf16.msra.mxu0 %v1328
  %1404 = vmatpush.bf16.msra.mxu0 %v1326
  %1405 = vmatpush.bf16.msra.mxu0 %v1324
  %1406 = vmatpush.bf16.msra.mxu0 %v1322
  %1407 = vmatpush.bf16.msra.mxu0 %v1320
  %1408 = vmatpush.bf16.msra.mxu0 %v1318
  %1409 = vmatpush.bf16.msra.mxu0 %v1316
  %1410 = vmatpush.bf16.msra.mxu0 %v1314
  %1411 = vmatmul.bf16.gmra.mxu0 %v1168
  %v1412 = vpop.f32.mrf.mxu0
  %v1413 = vadd.f32 %v1399, %v1412
  %v1414 = vpop.f32.mrf.mxu0
  %v1415 = vadd.f32 %v1401, %v1414
  %1416 = vdwg.mxu0
  %v1449 = vunpack.c.l.b16 %v1103
  %v1450 = vunpack.c.h.b16 %v1103
  %v1451 = vunpack.c.l.b16 %v1104
  %v1452 = vunpack.c.h.b16 %v1104
  %v1453 = vunpack.c.l.b16 %v1105
  %v1454 = vunpack.c.h.b16 %v1105
  %v1455 = vunpack.c.l.b16 %v1106
  %v1456 = vunpack.c.h.b16 %v1106
  %v1457 = vunpack.c.l.b16 %v1107
  %v1458 = vunpack.c.h.b16 %v1107
  %v1459 = vunpack.c.l.b16 %v1108
  %v1460 = vunpack.c.h.b16 %v1108
  %v1461 = vunpack.c.l.b16 %v1109
  %v1462 = vunpack.c.h.b16 %v1109
  %v1463 = vunpack.c.l.b16 %v1110
  %v1464 = vunpack.c.h.b16 %v1110
  %v1465 = vunpack.c.l.b16 %v1111
  %v1466 = vunpack.c.h.b16 %v1111
  %v1467 = vunpack.c.l.b16 %v1112
  %v1468 = vunpack.c.h.b16 %v1112
  %v1469 = vunpack.c.l.b16 %v1113
  %v1470 = vunpack.c.h.b16 %v1113
  %v1471 = vunpack.c.l.b16 %v1114
  %v1472 = vunpack.c.h.b16 %v1114
  %v1473 = vunpack.c.l.b16 %v1115
  %v1474 = vunpack.c.h.b16 %v1115
  %v1475 = vunpack.c.l.b16 %v1116
  %v1476 = vunpack.c.h.b16 %v1116
  %v1477 = vunpack.c.l.b16 %v1117
  %v1478 = vunpack.c.h.b16 %v1117
  %v1479 = vunpack.c.l.b16 %v1118
  %v1480 = vunpack.c.h.b16 %v1118
  %v1481 = vunpack.c.l.b16 %v1119
  %v1482 = vunpack.c.h.b16 %v1119
  %v1483 = vunpack.c.l.b16 %v1120
  %v1484 = vunpack.c.h.b16 %v1120
  %v1485 = vunpack.c.l.b16 %v1121
  %v1486 = vunpack.c.h.b16 %v1121
  %v1487 = vunpack.c.l.b16 %v1122
  %v1488 = vunpack.c.h.b16 %v1122
  %v1489 = vunpack.c.l.b16 %v1123
  %v1490 = vunpack.c.h.b16 %v1123
  %v1491 = vunpack.c.l.b16 %v1124
  %v1492 = vunpack.c.h.b16 %v1124
  %v1493 = vunpack.c.l.b16 %v1125
  %v1494 = vunpack.c.h.b16 %v1125
  %v1495 = vunpack.c.l.b16 %v1126
  %v1496 = vunpack.c.h.b16 %v1126
  %v1497 = vunpack.c.l.b16 %v1127
  %v1498 = vunpack.c.h.b16 %v1127
  %v1499 = vunpack.c.l.b16 %v1128
  %v1500 = vunpack.c.h.b16 %v1128
  %v1501 = vunpack.c.l.b16 %v1129
  %v1502 = vunpack.c.h.b16 %v1129
  %v1503 = vunpack.c.l.b16 %v1130
  %v1504 = vunpack.c.h.b16 %v1130
  %v1505 = vunpack.c.l.b16 %v1131
  %v1506 = vunpack.c.h.b16 %v1131
  %v1507 = vunpack.c.l.b16 %v1132
  %v1508 = vunpack.c.h.b16 %v1132
  %v1509 = vunpack.c.l.b16 %v1133
  %v1510 = vunpack.c.h.b16 %v1133
  %v1511 = vunpack.c.l.b16 %v1134
  %v1512 = vunpack.c.h.b16 %v1134
  %v1513 = vpack.c.b16 %v1451, %v1449
  %v1514 = vpack.c.b16 %v1452, %v1450
  %v1515 = vpack.c.b16 %v1455, %v1453
  %v1516 = vpack.c.b16 %v1456, %v1454
  %v1517 = vpack.c.b16 %v1459, %v1457
  %v1518 = vpack.c.b16 %v1460, %v1458
  %v1519 = vpack.c.b16 %v1463, %v1461
  %v1520 = vpack.c.b16 %v1464, %v1462
  %v1521 = vpack.c.b16 %v1467, %v1465
  %v1522 = vpack.c.b16 %v1468, %v1466
  %v1523 = vpack.c.b16 %v1471, %v1469
  %v1524 = vpack.c.b16 %v1472, %v1470
  %v1525 = vpack.c.b16 %v1475, %v1473
  %v1526 = vpack.c.b16 %v1476, %v1474
  %v1527 = vpack.c.b16 %v1479, %v1477
  %v1528 = vpack.c.b16 %v1480, %v1478
  %v1529 = vpack.c.b16 %v1483, %v1481
  %v1530 = vpack.c.b16 %v1484, %v1482
  %v1531 = vpack.c.b16 %v1487, %v1485
  %v1532 = vpack.c.b16 %v1488, %v1486
  %v1533 = vpack.c.b16 %v1491, %v1489
  %v1534 = vpack.c.b16 %v1492, %v1490
  %v1535 = vpack.c.b16 %v1495, %v1493
  %v1536 = vpack.c.b16 %v1496, %v1494
  %v1537 = vpack.c.b16 %v1499, %v1497
  %v1538 = vpack.c.b16 %v1500, %v1498
  %v1539 = vpack.c.b16 %v1503, %v1501
  %v1540 = vpack.c.b16 %v1504, %v1502
  %v1541 = vpack.c.b16 %v1507, %v1505
  %v1542 = vpack.c.b16 %v1508, %v1506
  %v1543 = vpack.c.b16 %v1511, %v1509
  %v1544 = vpack.c.b16 %v1512, %v1510
  %1577 = vmatpush.bf16.msra.mxu0 %v1527
  %1578 = vmatpush.bf16.msra.mxu0 %v1525
  %1579 = vmatpush.bf16.msra.mxu0 %v1523
  %1580 = vmatpush.bf16.msra.mxu0 %v1521
  %1581 = vmatpush.bf16.msra.mxu0 %v1519
  %1582 = vmatpush.bf16.msra.mxu0 %v1517
  %1583 = vmatpush.bf16.msra.mxu0 %v1515
  %1584 = vmatpush.bf16.msra.mxu0 %v1513
  %1585 = vmatmul.bf16.gmra.mxu0 %v1101
  %v1586 = vpop.f32.mrf.mxu0
  %v1587 = vadd.f32 %v1385, %v1586
  %v1588 = vpop.f32.mrf.mxu0
  %v1589 = vadd.f32 %v1387, %v1588
  %1590 = vdwg.mxu0
  %1591 = vmatpush.bf16.msra.mxu0 %v1543
  %1592 = vmatpush.bf16.msra.mxu0 %v1541
  %1593 = vmatpush.bf16.msra.mxu0 %v1539
  %1594 = vmatpush.bf16.msra.mxu0 %v1537
  %1595 = vmatpush.bf16.msra.mxu0 %v1535
  %1596 = vmatpush.bf16.msra.mxu0 %v1533
  %1597 = vmatpush.bf16.msra.mxu0 %v1531
  %1598 = vmatpush.bf16.msra.mxu0 %v1529
  %1599 = vmatmul.bf16.gmra.mxu0 %v1102
  %v1600 = vpop.f32.mrf.mxu0
  %v1601 = vadd.f32 %v1587, %v1600
  %v1602 = vpop.f32.mrf.mxu0
  %v1603 = vadd.f32 %v1589, %v1602
  %1604 = vdwg.mxu0
  %1605 = vmatpush.bf16.msra.mxu0 %v1528
  %1606 = vmatpush.bf16.msra.mxu0 %v1526
  %1607 = vmatpush.bf16.msra.mxu0 %v1524
  %1608 = vmatpush.bf16.msra.mxu0 %v1522
  %1609 = vmatpush.bf16.msra.mxu0 %v1520
  %1610 = vmatpush.bf16.msra.mxu0 %v1518
  %1611 = vmatpush.bf16.msra.mxu0 %v1516
  %1612 = vmatpush.bf16.msra.mxu0 %v1514
  %1613 = vmatmul.bf16.gmra.mxu0 %v1101
  %v1614 = vpop.f32.mrf.mxu0
  %v1615 = vadd.f32 %v1413, %v1614
  %v1616 = vpop.f32.mrf.mxu0
  %v1617 = vadd.f32 %v1415, %v1616
  %1618 = vdwg.mxu0
  %1619 = vmatpush.bf16.msra.mxu0 %v1544
  %1620 = vmatpush.bf16.msra.mxu0 %v1542
  %1621 = vmatpush.bf16.msra.mxu0 %v1540
  %1622 = vmatpush.bf16.msra.mxu0 %v1538
  %1623 = vmatpush.bf16.msra.mxu0 %v1536
  %1624 = vmatpush.bf16.msra.mxu0 %v1534
  %1625 = vmatpush.bf16.msra.mxu0 %v1532
  %1626 = vmatpush.bf16.msra.mxu0 %v1530
  %1627 = vmatmul.bf16.gmra.mxu0 %v1102
  %v1628 = vpop.f32.mrf.mxu0
  %v1629 = vadd.f32 %v1615, %v1628
  %v1630 = vpop.f32.mrf.mxu0
  %v1631 = vadd.f32 %v1617, %v1630
  %1632 = vdwg.mxu0
  %v1633 = vld [vmem:[#allocation2] sm:$0xfc]
  %v1634 = vld [vmem:[#allocation2 + $0x8] sm:$0xfc]
  %v1635 = vld [vmem:[#allocation2 + $0x10] sm:$0x3]
  %v1636 = vld [vmem:[#allocation2 + $0x18] sm:$0x3]
  %v1637 = vld [vmem:[#allocation2 + $0x20] sm:$0xfc]
  %v1638 = vld [vmem:[#allocation2 + $0x28] sm:$0xfc]
  %v1639 = vld [vmem:[#allocation2 + $0x30] sm:$0x3]
  %v1640 = vld [vmem:[#allocation2 + $0x38] sm:$0x3]
  %v1649 = vrot.slane %v1633, 2
  %v1650 = vrot.slane %v1635, 2
  %v1651 = vsel %vm596, %v1649, %v1650
  %v1652 = vrot.slane %v1634, 2
  %v1653 = vrot.slane %v1636, 2
  %v1654 = vsel %vm596, %v1652, %v1653
  %v1655 = vrot.slane %v1637, 2
  %v1656 = vrot.slane %v1639, 2
  %v1657 = vsel %vm596, %v1655, %v1656
  %v1658 = vrot.slane %v1638, 2
  %v1659 = vrot.slane %v1640, 2
  %v1660 = vsel %vm596, %v1658, %v1659
  %v1665 = vpack.c.bf16 %v1657, %v1651
  %v1666 = vpack.c.bf16 %v1660, %v1654
  %v1667 = vld [vmem:[%s2 + $0x200] sm:$0xff]
  %v1668 = vld [vmem:[%s2 + $0x208] sm:$0xff]
  %v1669 = vld [vmem:[%s2 + $0x210] sm:$0xff]
  %v1670 = vld [vmem:[%s2 + $0x218] sm:$0xff]
  %v1671 = vld [vmem:[%s2 + $0x220] sm:$0xff]
  %v1672 = vld [vmem:[%s2 + $0x228] sm:$0xff]
  %v1673 = vld [vmem:[%s2 + $0x230] sm:$0xff]
  %v1674 = vld [vmem:[%s2 + $0x238] sm:$0xff]
  %v1675 = vld [vmem:[%s2 + $0x240] sm:$0xff]
  %v1676 = vld [vmem:[%s2 + $0x248] sm:$0xff]
  %v1677 = vld [vmem:[%s2 + $0x250] sm:$0xff]
  %v1678 = vld [vmem:[%s2 + $0x258] sm:$0xff]
  %v1679 = vld [vmem:[%s2 + $0x260] sm:$0xff]
  %v1680 = vld [vmem:[%s2 + $0x268] sm:$0xff]
  %v1681 = vld [vmem:[%s2 + $0x270] sm:$0xff]
  %v1682 = vld [vmem:[%s2 + $0x278] sm:$0xff]
  %v1683 = vld [vmem:[%s2 + $0x280] sm:$0xff]
  %v1684 = vld [vmem:[%s2 + $0x288] sm:$0xff]
  %v1685 = vld [vmem:[%s2 + $0x290] sm:$0xff]
  %v1686 = vld [vmem:[%s2 + $0x298] sm:$0xff]
  %v1687 = vld [vmem:[%s2 + $0x2a0] sm:$0xff]
  %v1688 = vld [vmem:[%s2 + $0x2a8] sm:$0xff]
  %v1689 = vld [vmem:[%s2 + $0x2b0] sm:$0xff]
  %v1690 = vld [vmem:[%s2 + $0x2b8] sm:$0xff]
  %v1691 = vld [vmem:[%s2 + $0x2c0] sm:$0xff]
  %v1692 = vld [vmem:[%s2 + $0x2c8] sm:$0xff]
  %v1693 = vld [vmem:[%s2 + $0x2d0] sm:$0xff]
  %v1694 = vld [vmem:[%s2 + $0x2d8] sm:$0xff]
  %v1695 = vld [vmem:[%s2 + $0x2e0] sm:$0xff]
  %v1696 = vld [vmem:[%s2 + $0x2e8] sm:$0xff]
  %v1697 = vld [vmem:[%s2 + $0x2f0] sm:$0xff]
  %v1698 = vld [vmem:[%s2 + $0x2f8] sm:$0xff]
  %v1731 = vunpack.c.l.b16 %v1667
  %v1732 = vunpack.c.h.b16 %v1667
  %v1733 = vunpack.c.l.b16 %v1668
  %v1734 = vunpack.c.h.b16 %v1668
  %v1735 = vunpack.c.l.b16 %v1669
  %v1736 = vunpack.c.h.b16 %v1669
  %v1737 = vunpack.c.l.b16 %v1670
  %v1738 = vunpack.c.h.b16 %v1670
  %v1739 = vunpack.c.l.b16 %v1671
  %v1740 = vunpack.c.h.b16 %v1671
  %v1741 = vunpack.c.l.b16 %v1672
  %v1742 = vunpack.c.h.b16 %v1672
  %v1743 = vunpack.c.l.b16 %v1673
  %v1744 = vunpack.c.h.b16 %v1673
  %v1745 = vunpack.c.l.b16 %v1674
  %v1746 = vunpack.c.h.b16 %v1674
  %v1747 = vunpack.c.l.b16 %v1675
  %v1748 = vunpack.c.h.b16 %v1675
  %v1749 = vunpack.c.l.b16 %v1676
  %v1750 = vunpack.c.h.b16 %v1676
  %v1751 = vunpack.c.l.b16 %v1677
  %v1752 = vunpack.c.h.b16 %v1677
  %v1753 = vunpack.c.l.b16 %v1678
  %v1754 = vunpack.c.h.b16 %v1678
  %v1755 = vunpack.c.l.b16 %v1679
  %v1756 = vunpack.c.h.b16 %v1679
  %v1757 = vunpack.c.l.b16 %v1680
  %v1758 = vunpack.c.h.b16 %v1680
  %v1759 = vunpack.c.l.b16 %v1681
  %v1760 = vunpack.c.h.b16 %v1681
  %v1761 = vunpack.c.l.b16 %v1682
  %v1762 = vunpack.c.h.b16 %v1682
  %v1763 = vunpack.c.l.b16 %v1683
  %v1764 = vunpack.c.h.b16 %v1683
  %v1765 = vunpack.c.l.b16 %v1684
  %v1766 = vunpack.c.h.b16 %v1684
  %v1767 = vunpack.c.l.b16 %v1685
  %v1768 = vunpack.c.h.b16 %v1685
  %v1769 = vunpack.c.l.b16 %v1686
  %v1770 = vunpack.c.h.b16 %v1686
  %v1771 = vunpack.c.l.b16 %v1687
  %v1772 = vunpack.c.h.b16 %v1687
  %v1773 = vunpack.c.l.b16 %v1688
  %v1774 = vunpack.c.h.b16 %v1688
  %v1775 = vunpack.c.l.b16 %v1689
  %v1776 = vunpack.c.h.b16 %v1689
  %v1777 = vunpack.c.l.b16 %v1690
  %v1778 = vunpack.c.h.b16 %v1690
  %v1779 = vunpack.c.l.b16 %v1691
  %v1780 = vunpack.c.h.b16 %v1691
  %v1781 = vunpack.c.l.b16 %v1692
  %v1782 = vunpack.c.h.b16 %v1692
  %v1783 = vunpack.c.l.b16 %v1693
  %v1784 = vunpack.c.h.b16 %v1693
  %v1785 = vunpack.c.l.b16 %v1694
  %v1786 = vunpack.c.h.b16 %v1694
  %v1787 = vunpack.c.l.b16 %v1695
  %v1788 = vunpack.c.h.b16 %v1695
  %v1789 = vunpack.c.l.b16 %v1696
  %v1790 = vunpack.c.h.b16 %v1696
  %v1791 = vunpack.c.l.b16 %v1697
  %v1792 = vunpack.c.h.b16 %v1697
  %v1793 = vunpack.c.l.b16 %v1698
  %v1794 = vunpack.c.h.b16 %v1698
  %v1795 = vpack.c.b16 %v1733, %v1731
  %v1796 = vpack.c.b16 %v1734, %v1732
  %v1797 = vpack.c.b16 %v1737, %v1735
  %v1798 = vpack.c.b16 %v1738, %v1736
  %v1799 = vpack.c.b16 %v1741, %v1739
  %v1800 = vpack.c.b16 %v1742, %v1740
  %v1801 = vpack.c.b16 %v1745, %v1743
  %v1802 = vpack.c.b16 %v1746, %v1744
  %v1803 = vpack.c.b16 %v1749, %v1747
  %v1804 = vpack.c.b16 %v1750, %v1748
  %v1805 = vpack.c.b16 %v1753, %v1751
  %v1806 = vpack.c.b16 %v1754, %v1752
  %v1807 = vpack.c.b16 %v1757, %v1755
  %v1808 = vpack.c.b16 %v1758, %v1756
  %v1809 = vpack.c.b16 %v1761, %v1759
  %v1810 = vpack.c.b16 %v1762, %v1760
  %v1811 = vpack.c.b16 %v1765, %v1763
  %v1812 = vpack.c.b16 %v1766, %v1764
  %v1813 = vpack.c.b16 %v1769, %v1767
  %v1814 = vpack.c.b16 %v1770, %v1768
  %v1815 = vpack.c.b16 %v1773, %v1771
  %v1816 = vpack.c.b16 %v1774, %v1772
  %v1817 = vpack.c.b16 %v1777, %v1775
  %v1818 = vpack.c.b16 %v1778, %v1776
  %v1819 = vpack.c.b16 %v1781, %v1779
  %v1820 = vpack.c.b16 %v1782, %v1780
  %v1821 = vpack.c.b16 %v1785, %v1783
  %v1822 = vpack.c.b16 %v1786, %v1784
  %v1823 = vpack.c.b16 %v1789, %v1787
  %v1824 = vpack.c.b16 %v1790, %v1788
  %v1825 = vpack.c.b16 %v1793, %v1791
  %v1826 = vpack.c.b16 %v1794, %v1792
  %1859 = vmatpush.bf16.msra.mxu0 %v1809
  %1860 = vmatpush.bf16.msra.mxu0 %v1807
  %1861 = vmatpush.bf16.msra.mxu0 %v1805
  %1862 = vmatpush.bf16.msra.mxu0 %v1803
  %1863 = vmatpush.bf16.msra.mxu0 %v1801
  %1864 = vmatpush.bf16.msra.mxu0 %v1799
  %1865 = vmatpush.bf16.msra.mxu0 %v1797
  %1866 = vmatpush.bf16.msra.mxu0 %v1795
  %1867 = vmatmul.bf16.gmra.mxu0 %v1665
  %v1868 = vpop.f32.mrf.mxu0
  %v1869 = vadd.f32 0.0, %v1868
  %v1870 = vpop.f32.mrf.mxu0
  %v1871 = vadd.f32 0.0, %v1870
  %1872 = vdwg.mxu0
  %1873 = vmatpush.bf16.msra.mxu0 %v1825
  %1874 = vmatpush.bf16.msra.mxu0 %v1823
  %1875 = vmatpush.bf16.msra.mxu0 %v1821
  %1876 = vmatpush.bf16.msra.mxu0 %v1819
  %1877 = vmatpush.bf16.msra.mxu0 %v1817
  %1878 = vmatpush.bf16.msra.mxu0 %v1815
  %1879 = vmatpush.bf16.msra.mxu0 %v1813
  %1880 = vmatpush.bf16.msra.mxu0 %v1811
  %1881 = vmatmul.bf16.gmra.mxu0 %v1666
  %v1882 = vpop.f32.mrf.mxu0
  %v1883 = vadd.f32 %v1869, %v1882
  %v1884 = vpop.f32.mrf.mxu0
  %v1885 = vadd.f32 %v1871, %v1884
  %1886 = vdwg.mxu0
  %1887 = vmatpush.bf16.msra.mxu0 %v1810
  %1888 = vmatpush.bf16.msra.mxu0 %v1808
  %1889 = vmatpush.bf16.msra.mxu0 %v1806
  %1890 = vmatpush.bf16.msra.mxu0 %v1804
  %1891 = vmatpush.bf16.msra.mxu0 %v1802
  %1892 = vmatpush.bf16.msra.mxu0 %v1800
  %1893 = vmatpush.bf16.msra.mxu0 %v1798
  %1894 = vmatpush.bf16.msra.mxu0 %v1796
  %1895 = vmatmul.bf16.gmra.mxu0 %v1665
  %v1896 = vpop.f32.mrf.mxu0
  %v1897 = vadd.f32 0.0, %v1896
  %v1898 = vpop.f32.mrf.mxu0
  %v1899 = vadd.f32 0.0, %v1898
  %1900 = vdwg.mxu0
  %1901 = vmatpush.bf16.msra.mxu0 %v1826
  %1902 = vmatpush.bf16.msra.mxu0 %v1824
  %1903 = vmatpush.bf16.msra.mxu0 %v1822
  %1904 = vmatpush.bf16.msra.mxu0 %v1820
  %1905 = vmatpush.bf16.msra.mxu0 %v1818
  %1906 = vmatpush.bf16.msra.mxu0 %v1816
  %1907 = vmatpush.bf16.msra.mxu0 %v1814
  %1908 = vmatpush.bf16.msra.mxu0 %v1812
  %1909 = vmatmul.bf16.gmra.mxu0 %v1666
  %v1910 = vpop.f32.mrf.mxu0
  %v1911 = vadd.f32 %v1897, %v1910
  %v1912 = vpop.f32.mrf.mxu0
  %v1913 = vadd.f32 %v1899, %v1912
  %1914 = vdwg.mxu0
  %v1915 = vadd.f32 %v1601, %v1883
  %v1916 = vadd.f32 %v1629, %v1911
  %v1917 = vadd.f32 %v1603, %v1885
  %v1918 = vadd.f32 %v1631, %v1913
  %s1919 = scalar_lea.vmem %s1, 18
  %v1920 = vld [vmem:[%s1919] ss:$8 sm:$0x3]
  %v1922 = vperm.slane %v1920, 0
  %v1923 = vperm.slane %v1920, 1
  %v1926 = vadd.f32 %v1915, %v1922
  %v1927 = vadd.f32 %v1916, %v1923
  %v1928 = vadd.f32 %v1917, %v1922
  %v1929 = vadd.f32 %v1918, %v1923
  %v1930 = vmax.f32 %v1926, 0.0
  %v1931 = vmax.f32 %v1927, 0.0
  %v1932 = vmax.f32 %v1928, 0.0
  %v1933 = vmax.f32 %v1929, 0.0
  %v1938 = vrot.slane %v1930, 1
  %v1939 = vrot.slane %v1931, 1
  %v1940 = vrot.slane %v1932, 1
  %v1941 = vrot.slane %v1933, 1
  %v1946 = vmax.f32 %v1930, %v1938
  %v1947 = vmax.f32 %v1931, %v1939
  %v1948 = vmax.f32 %v1932, %v1940
  %v1949 = vmax.f32 %v1933, %v1941
  %v1954 = vrot.slane %v1946, 1
  %v1955 = vrot.slane %v1947, 1
  %v1956 = vrot.slane %v1948, 1
  %v1957 = vrot.slane %v1949, 1
  %v1962 = vrot.slane %v1946, 2
  %v1963 = vrot.slane %v1947, 2
  %v1964 = vrot.slane %v1948, 2
  %v1965 = vrot.slane %v1949, 2
  %v1970 = vrot.slane %v1946, 3
  %v1971 = vrot.slane %v1947, 3
  %v1972 = vrot.slane %v1948, 3
  %v1973 = vrot.slane %v1949, 3
  %v1978 = vsel %vm1010, %v1946, %v1954
  %v1979 = vsel %vm1010, %v1947, %v1955
  %v1980 = vsel %vm1010, %v1948, %v1956
  %v1981 = vsel %vm1010, %v1949, %v1957
  %v1982 = vsel %vm1015, %v1978, %v1962
  %v1983 = vsel %vm1015, %v1979, %v1963
  %v1984 = vsel %vm1015, %v1980, %v1964
  %v1985 = vsel %vm1015, %v1981, %v1965
  %v1986 = vsel %vm1020, %v1982, %v1970
  %v1987 = vsel %vm1020, %v1983, %v1971
  %v1988 = vsel %vm1020, %v1984, %v1972
  %v1989 = vsel %vm1020, %v1985, %v1973
  %1990 = vrot.lane.b32.xlu0 %v1986, 96
  %v1991 = vpop.permute.xlu0 %1990
  %1992 = vrot.lane.b32.xlu0 %v1988, 96
  %v1993 = vpop.permute.xlu0 %1992
  %1994 = vrot.lane.b32.xlu0 %v1987, 96
  %v1995 = vpop.permute.xlu0 %1994
  %1996 = vrot.lane.b32.xlu0 %v1989, 96
  %v1997 = vpop.permute.xlu0 %1996
  %vm1998 = vcmp.lt.s32.totalorder %v1052, 96
  %v1999 = vsel %vm1998, %v1991, %v1995
  %v2000 = vsel %vm1998, %v1993, %v1997
  %v2001 = vsel %vm1998, %v1995, %v1991
  %v2002 = vsel %vm1998, %v1997, %v1993
  %v2003 = vmax.f32 %v1986, %v1999
  %v2004 = vmax.f32 %v1987, %v2001
  %v2005 = vmax.f32 %v1988, %v2000
  %v2006 = vmax.f32 %v1989, %v2002
  %v2011 = vrot.slane %v2005, 7
  %vm2012 = vcmask 1041409
  %v2013 = vsel %vm2012, %v2011, %v2003
  %v2014 = vrot.slane %v2006, 7
  %v2015 = vsel %vm2012, %v2014, %v2004
  %v2018 = vrot.slane %v2003, 1
  %v2019 = vsel %vm2012, %v2005, %v2018
  %v2020 = vrot.slane %v2004, 1
  %v2021 = vsel %vm2012, %v2006, %v2020
  %v2024 = vrot.slane %v2003, 2
  %v2025 = vrot.slane %v2005, 1
  %v2026 = vsel %vm2012, %v2025, %v2024
  %v2027 = vrot.slane %v2004, 2
  %v2028 = vrot.slane %v2006, 1
  %v2029 = vsel %vm2012, %v2028, %v2027
  %v2032 = vrot.slane %v2003, 3
  %v2033 = vrot.slane %v2005, 2
  %v2034 = vsel %vm2012, %v2033, %v2032
  %v2035 = vrot.slane %v2004, 3
  %v2036 = vrot.slane %v2006, 2
  %v2037 = vsel %vm2012, %v2036, %v2035
  %v2040 = vsel %vm1015, %v2013, 0.0
  %v2041 = vsel %vm1015, %v2015, 0.0
  %v2042 = vsel %vm1015, %v2019, 0.0
  %v2043 = vsel %vm1015, %v2021, 0.0
  %v2044 = vsel %vm1015, %v2026, 0.0
  %v2045 = vsel %vm1015, %v2029, 0.0
  %v2046 = vsel %vm1015, %v2034, 0.0
  %v2047 = vsel %vm1015, %v2037, 0.0
  %v2048 = vpack.c.bf16 %v2040, %v2040
  %v2049 = vpack.c.bf16 %v2041, %v2041
  %v2050 = vpack.c.bf16 %v2042, %v2042
  %v2051 = vpack.c.bf16 %v2043, %v2043
  %v2052 = vpack.c.bf16 %v2044, %v2044
  %v2053 = vpack.c.bf16 %v2045, %v2045
  %v2054 = vpack.c.bf16 %v2046, %v2046
  %v2055 = vpack.c.bf16 %v2047, %v2047
  %v2056 = vld [vmem:[%s2 + $0x300] sm:$0xf]
  %v2057 = vld [vmem:[%s2 + $0x308] sm:$0xf]
  %v2058 = vld [vmem:[%s2 + $0x310] sm:$0xf]
  %v2059 = vld [vmem:[%s2 + $0x318] sm:$0xf]
  %v2060 = vld [vmem:[%s2 + $0x320] sm:$0xf]
  %v2061 = vld [vmem:[%s2 + $0x328] sm:$0xf]
  %v2062 = vld [vmem:[%s2 + $0x330] sm:$0xf]
  %v2063 = vld [vmem:[%s2 + $0x338] sm:$0xf]
  %v2064 = vld [vmem:[%s2 + $0x340] sm:$0xf]
  %v2065 = vld [vmem:[%s2 + $0x348] sm:$0xf]
  %v2066 = vld [vmem:[%s2 + $0x350] sm:$0xf]
  %v2067 = vld [vmem:[%s2 + $0x358] sm:$0xf]
  %v2068 = vld [vmem:[%s2 + $0x360] sm:$0xf]
  %v2069 = vld [vmem:[%s2 + $0x368] sm:$0xf]
  %v2070 = vld [vmem:[%s2 + $0x370] sm:$0xf]
  %v2071 = vld [vmem:[%s2 + $0x378] sm:$0xf]
  %v2072 = vld [vmem:[%s2 + $0x380] sm:$0xf]
  %v2073 = vld [vmem:[%s2 + $0x388] sm:$0xf]
  %v2074 = vld [vmem:[%s2 + $0x390] sm:$0xf]
  %v2075 = vld [vmem:[%s2 + $0x398] sm:$0xf]
  %v2076 = vld [vmem:[%s2 + $0x3a0] sm:$0xf]
  %v2077 = vld [vmem:[%s2 + $0x3a8] sm:$0xf]
  %v2078 = vld [vmem:[%s2 + $0x3b0] sm:$0xf]
  %v2079 = vld [vmem:[%s2 + $0x3b8] sm:$0xf]
  %v2080 = vld [vmem:[%s2 + $0x3c0] sm:$0xf]
  %v2081 = vld [vmem:[%s2 + $0x3c8] sm:$0xf]
  %v2082 = vld [vmem:[%s2 + $0x3d0] sm:$0xf]
  %v2083 = vld [vmem:[%s2 + $0x3d8] sm:$0xf]
  %v2084 = vld [vmem:[%s2 + $0x3e0] sm:$0xf]
  %v2085 = vld [vmem:[%s2 + $0x3e8] sm:$0xf]
  %v2086 = vld [vmem:[%s2 + $0x3f0] sm:$0xf]
  %v2087 = vld [vmem:[%s2 + $0x3f8] sm:$0xf]
  %v2088 = vld [vmem:[%s2 + $0x400] sm:$0xf]
  %v2089 = vld [vmem:[%s2 + $0x408] sm:$0xf]
  %v2090 = vld [vmem:[%s2 + $0x410] sm:$0xf]
  %v2091 = vld [vmem:[%s2 + $0x418] sm:$0xf]
  %v2092 = vld [vmem:[%s2 + $0x420] sm:$0xf]
  %v2093 = vld [vmem:[%s2 + $0x428] sm:$0xf]
  %v2094 = vld [vmem:[%s2 + $0x430] sm:$0xf]
  %v2095 = vld [vmem:[%s2 + $0x438] sm:$0xf]
  %v2096 = vld [vmem:[%s2 + $0x440] sm:$0xf]
  %v2097 = vld [vmem:[%s2 + $0x448] sm:$0xf]
  %v2098 = vld [vmem:[%s2 + $0x450] sm:$0xf]
  %v2099 = vld [vmem:[%s2 + $0x458] sm:$0xf]
  %v2100 = vld [vmem:[%s2 + $0x460] sm:$0xf]
  %v2101 = vld [vmem:[%s2 + $0x468] sm:$0xf]
  %v2102 = vld [vmem:[%s2 + $0x470] sm:$0xf]
  %v2103 = vld [vmem:[%s2 + $0x478] sm:$0xf]
  %v2104 = vld [vmem:[%s2 + $0x480] sm:$0xf]
  %v2105 = vld [vmem:[%s2 + $0x488] sm:$0xf]
  %v2106 = vld [vmem:[%s2 + $0x490] sm:$0xf]
  %v2107 = vld [vmem:[%s2 + $0x498] sm:$0xf]
  %v2108 = vld [vmem:[%s2 + $0x4a0] sm:$0xf]
  %v2109 = vld [vmem:[%s2 + $0x4a8] sm:$0xf]
  %v2110 = vld [vmem:[%s2 + $0x4b0] sm:$0xf]
  %v2111 = vld [vmem:[%s2 + $0x4b8] sm:$0xf]
  %v2112 = vld [vmem:[%s2 + $0x4c0] sm:$0xf]
  %v2113 = vld [vmem:[%s2 + $0x4c8] sm:$0xf]
  %v2114 = vld [vmem:[%s2 + $0x4d0] sm:$0xf]
  %v2115 = vld [vmem:[%s2 + $0x4d8] sm:$0xf]
  %v2116 = vld [vmem:[%s2 + $0x4e0] sm:$0xf]
  %v2117 = vld [vmem:[%s2 + $0x4e8] sm:$0xf]
  %v2118 = vld [vmem:[%s2 + $0x4f0] sm:$0xf]
  %v2119 = vld [vmem:[%s2 + $0x4f8] sm:$0xf]
  %v2120 = vld [vmem:[%s2 + $0x500] sm:$0xf]
  %v2121 = vld [vmem:[%s2 + $0x508] sm:$0xf]
  %v2122 = vld [vmem:[%s2 + $0x510] sm:$0xf]
  %v2123 = vld [vmem:[%s2 + $0x518] sm:$0xf]
  %v2124 = vld [vmem:[%s2 + $0x520] sm:$0xf]
  %v2125 = vld [vmem:[%s2 + $0x528] sm:$0xf]
  %v2126 = vld [vmem:[%s2 + $0x530] sm:$0xf]
  %v2127 = vld [vmem:[%s2 + $0x538] sm:$0xf]
  %v2128 = vld [vmem:[%s2 + $0x540] sm:$0xf]
  %v2129 = vld [vmem:[%s2 + $0x548] sm:$0xf]
  %v2130 = vld [vmem:[%s2 + $0x550] sm:$0xf]
  %v2131 = vld [vmem:[%s2 + $0x558] sm:$0xf]
  %v2132 = vld [vmem:[%s2 + $0x560] sm:$0xf]
  %v2133 = vld [vmem:[%s2 + $0x568] sm:$0xf]
  %v2134 = vld [vmem:[%s2 + $0x570] sm:$0xf]
  %v2135 = vld [vmem:[%s2 + $0x578] sm:$0xf]
  %v2136 = vld [vmem:[%s2 + $0x580] sm:$0xf]
  %v2137 = vld [vmem:[%s2 + $0x588] sm:$0xf]
  %v2138 = vld [vmem:[%s2 + $0x590] sm:$0xf]
  %v2139 = vld [vmem:[%s2 + $0x598] sm:$0xf]
  %v2140 = vld [vmem:[%s2 + $0x5a0] sm:$0xf]
  %v2141 = vld [vmem:[%s2 + $0x5a8] sm:$0xf]
  %v2142 = vld [vmem:[%s2 + $0x5b0] sm:$0xf]
  %v2143 = vld [vmem:[%s2 + $0x5b8] sm:$0xf]
  %v2144 = vld [vmem:[%s2 + $0x5c0] sm:$0xf]
  %v2145 = vld [vmem:[%s2 + $0x5c8] sm:$0xf]
  %v2146 = vld [vmem:[%s2 + $0x5d0] sm:$0xf]
  %v2147 = vld [vmem:[%s2 + $0x5d8] sm:$0xf]
  %v2148 = vld [vmem:[%s2 + $0x5e0] sm:$0xf]
  %v2149 = vld [vmem:[%s2 + $0x5e8] sm:$0xf]
  %v2150 = vld [vmem:[%s2 + $0x5f0] sm:$0xf]
  %v2151 = vld [vmem:[%s2 + $0x5f8] sm:$0xf]
  %v2152 = vld [vmem:[%s2 + $0x600] sm:$0xf]
  %v2153 = vld [vmem:[%s2 + $0x608] sm:$0xf]
  %v2154 = vld [vmem:[%s2 + $0x610] sm:$0xf]
  %v2155 = vld [vmem:[%s2 + $0x618] sm:$0xf]
  %v2156 = vld [vmem:[%s2 + $0x620] sm:$0xf]
  %v2157 = vld [vmem:[%s2 + $0x628] sm:$0xf]
  %v2158 = vld [vmem:[%s2 + $0x630] sm:$0xf]
  %v2159 = vld [vmem:[%s2 + $0x638] sm:$0xf]
  %v2160 = vld [vmem:[%s2 + $0x640] sm:$0xf]
  %v2161 = vld [vmem:[%s2 + $0x648] sm:$0xf]
  %v2162 = vld [vmem:[%s2 + $0x650] sm:$0xf]
  %v2163 = vld [vmem:[%s2 + $0x658] sm:$0xf]
  %v2164 = vld [vmem:[%s2 + $0x660] sm:$0xf]
  %v2165 = vld [vmem:[%s2 + $0x668] sm:$0xf]
  %v2166 = vld [vmem:[%s2 + $0x670] sm:$0xf]
  %v2167 = vld [vmem:[%s2 + $0x678] sm:$0xf]
  %v2168 = vld [vmem:[%s2 + $0x680] sm:$0xf]
  %v2169 = vld [vmem:[%s2 + $0x688] sm:$0xf]
  %v2170 = vld [vmem:[%s2 + $0x690] sm:$0xf]
  %v2171 = vld [vmem:[%s2 + $0x698] sm:$0xf]
  %v2172 = vld [vmem:[%s2 + $0x6a0] sm:$0xf]
  %v2173 = vld [vmem:[%s2 + $0x6a8] sm:$0xf]
  %v2174 = vld [vmem:[%s2 + $0x6b0] sm:$0xf]
  %v2175 = vld [vmem:[%s2 + $0x6b8] sm:$0xf]
  %v2176 = vld [vmem:[%s2 + $0x6c0] sm:$0xf]
  %v2177 = vld [vmem:[%s2 + $0x6c8] sm:$0xf]
  %v2178 = vld [vmem:[%s2 + $0x6d0] sm:$0xf]
  %v2179 = vld [vmem:[%s2 + $0x6d8] sm:$0xf]
  %v2180 = vld [vmem:[%s2 + $0x6e0] sm:$0xf]
  %v2181 = vld [vmem:[%s2 + $0x6e8] sm:$0xf]
  %v2182 = vld [vmem:[%s2 + $0x6f0] sm:$0xf]
  %v2183 = vld [vmem:[%s2 + $0x6f8] sm:$0xf]
  %v2184 = vld [vmem:[%s1 + $0x13] ss:$0 sm:$0xff]
  %v2313 = vunpack.c.l.b16 %v2056
  %v2314 = vunpack.c.l.b16 %v2057
  %v2315 = vunpack.c.l.b16 %v2058
  %v2316 = vunpack.c.l.b16 %v2059
  %v2317 = vunpack.c.l.b16 %v2060
  %v2318 = vunpack.c.l.b16 %v2061
  %v2319 = vunpack.c.l.b16 %v2062
  %v2320 = vunpack.c.l.b16 %v2063
  %v2321 = vunpack.c.l.b16 %v2064
  %v2322 = vunpack.c.l.b16 %v2065
  %v2323 = vunpack.c.l.b16 %v2066
  %v2324 = vunpack.c.l.b16 %v2067
  %v2325 = vunpack.c.l.b16 %v2068
  %v2326 = vunpack.c.l.b16 %v2069
  %v2327 = vunpack.c.l.b16 %v2070
  %v2328 = vunpack.c.l.b16 %v2071
  %v2329 = vunpack.c.l.b16 %v2072
  %v2330 = vunpack.c.l.b16 %v2073
  %v2331 = vunpack.c.l.b16 %v2074
  %v2332 = vunpack.c.l.b16 %v2075
  %v2333 = vunpack.c.l.b16 %v2076
  %v2334 = vunpack.c.l.b16 %v2077
  %v2335 = vunpack.c.l.b16 %v2078
  %v2336 = vunpack.c.l.b16 %v2079
  %v2337 = vunpack.c.l.b16 %v2080
  %v2338 = vunpack.c.l.b16 %v2081
  %v2339 = vunpack.c.l.b16 %v2082
  %v2340 = vunpack.c.l.b16 %v2083
  %v2341 = vunpack.c.l.b16 %v2084
  %v2342 = vunpack.c.l.b16 %v2085
  %v2343 = vunpack.c.l.b16 %v2086
  %v2344 = vunpack.c.l.b16 %v2087
  %v2345 = vunpack.c.l.b16 %v2088
  %v2346 = vunpack.c.l.b16 %v2089
  %v2347 = vunpack.c.l.b16 %v2090
  %v2348 = vunpack.c.l.b16 %v2091
  %v2349 = vunpack.c.l.b16 %v2092
  %v2350 = vunpack.c.l.b16 %v2093
  %v2351 = vunpack.c.l.b16 %v2094
  %v2352 = vunpack.c.l.b16 %v2095
  %v2353 = vunpack.c.l.b16 %v2096
  %v2354 = vunpack.c.l.b16 %v2097
  %v2355 = vunpack.c.l.b16 %v2098
  %v2356 = vunpack.c.l.b16 %v2099
  %v2357 = vunpack.c.l.b16 %v2100
  %v2358 = vunpack.c.l.b16 %v2101
  %v2359 = vunpack.c.l.b16 %v2102
  %v2360 = vunpack.c.l.b16 %v2103
  %v2361 = vunpack.c.l.b16 %v2104
  %v2362 = vunpack.c.l.b16 %v2105
  %v2363 = vunpack.c.l.b16 %v2106
  %v2364 = vunpack.c.l.b16 %v2107
  %v2365 = vunpack.c.l.b16 %v2108
  %v2366 = vunpack.c.l.b16 %v2109
  %v2367 = vunpack.c.l.b16 %v2110
  %v2368 = vunpack.c.l.b16 %v2111
  %v2369 = vunpack.c.l.b16 %v2112
  %v2370 = vunpack.c.l.b16 %v2113
  %v2371 = vunpack.c.l.b16 %v2114
  %v2372 = vunpack.c.l.b16 %v2115
  %v2373 = vunpack.c.l.b16 %v2116
  %v2374 = vunpack.c.l.b16 %v2117
  %v2375 = vunpack.c.l.b16 %v2118
  %v2376 = vunpack.c.l.b16 %v2119
  %v2377 = vunpack.c.l.b16 %v2120
  %v2378 = vunpack.c.l.b16 %v2121
  %v2379 = vunpack.c.l.b16 %v2122
  %v2380 = vunpack.c.l.b16 %v2123
  %v2381 = vunpack.c.l.b16 %v2124
  %v2382 = vunpack.c.l.b16 %v2125
  %v2383 = vunpack.c.l.b16 %v2126
  %v2384 = vunpack.c.l.b16 %v2127
  %v2385 = vunpack.c.l.b16 %v2128
  %v2386 = vunpack.c.l.b16 %v2129
  %v2387 = vunpack.c.l.b16 %v2130
  %v2388 = vunpack.c.l.b16 %v2131
  %v2389 = vunpack.c.l.b16 %v2132
  %v2390 = vunpack.c.l.b16 %v2133
  %v2391 = vunpack.c.l.b16 %v2134
  %v2392 = vunpack.c.l.b16 %v2135
  %v2393 = vunpack.c.l.b16 %v2136
  %v2394 = vunpack.c.l.b16 %v2137
  %v2395 = vunpack.c.l.b16 %v2138
  %v2396 = vunpack.c.l.b16 %v2139
  %v2397 = vunpack.c.l.b16 %v2140
  %v2398 = vunpack.c.l.b16 %v2141
  %v2399 = vunpack.c.l.b16 %v2142
  %v2400 = vunpack.c.l.b16 %v2143
  %v2401 = vunpack.c.l.b16 %v2144
  %v2402 = vunpack.c.l.b16 %v2145
  %v2403 = vunpack.c.l.b16 %v2146
  %v2404 = vunpack.c.l.b16 %v2147
  %v2405 = vunpack.c.l.b16 %v2148
  %v2406 = vunpack.c.l.b16 %v2149
  %v2407 = vunpack.c.l.b16 %v2150
  %v2408 = vunpack.c.l.b16 %v2151
  %v2409 = vunpack.c.l.b16 %v2152
  %v2410 = vunpack.c.l.b16 %v2153
  %v2411 = vunpack.c.l.b16 %v2154
  %v2412 = vunpack.c.l.b16 %v2155
  %v2413 = vunpack.c.l.b16 %v2156
  %v2414 = vunpack.c.l.b16 %v2157
  %v2415 = vunpack.c.l.b16 %v2158
  %v2416 = vunpack.c.l.b16 %v2159
  %v2417 = vunpack.c.l.b16 %v2160
  %v2418 = vunpack.c.l.b16 %v2161
  %v2419 = vunpack.c.l.b16 %v2162
  %v2420 = vunpack.c.l.b16 %v2163
  %v2421 = vunpack.c.l.b16 %v2164
  %v2422 = vunpack.c.l.b16 %v2165
  %v2423 = vunpack.c.l.b16 %v2166
  %v2424 = vunpack.c.l.b16 %v2167
  %v2425 = vunpack.c.l.b16 %v2168
  %v2426 = vunpack.c.l.b16 %v2169
  %v2427 = vunpack.c.l.b16 %v2170
  %v2428 = vunpack.c.l.b16 %v2171
  %v2429 = vunpack.c.l.b16 %v2172
  %v2430 = vunpack.c.l.b16 %v2173
  %v2431 = vunpack.c.l.b16 %v2174
  %v2432 = vunpack.c.l.b16 %v2175
  %v2433 = vunpack.c.l.b16 %v2176
  %v2434 = vunpack.c.l.b16 %v2177
  %v2435 = vunpack.c.l.b16 %v2178
  %v2436 = vunpack.c.l.b16 %v2179
  %v2437 = vunpack.c.l.b16 %v2180
  %v2438 = vunpack.c.l.b16 %v2181
  %v2439 = vunpack.c.l.b16 %v2182
  %v2440 = vunpack.c.l.b16 %v2183
  %v2441 = vpack.c.b16 %v2314, %v2313
  %v2442 = vpack.c.b16 %v2316, %v2315
  %v2443 = vpack.c.b16 %v2318, %v2317
  %v2444 = vpack.c.b16 %v2320, %v2319
  %v2445 = vpack.c.b16 %v2322, %v2321
  %v2446 = vpack.c.b16 %v2324, %v2323
  %v2447 = vpack.c.b16 %v2326, %v2325
  %v2448 = vpack.c.b16 %v2328, %v2327
  %v2449 = vpack.c.b16 %v2330, %v2329
  %v2450 = vpack.c.b16 %v2332, %v2331
  %v2451 = vpack.c.b16 %v2334, %v2333
  %v2452 = vpack.c.b16 %v2336, %v2335
  %v2453 = vpack.c.b16 %v2338, %v2337
  %v2454 = vpack.c.b16 %v2340, %v2339
  %v2455 = vpack.c.b16 %v2342, %v2341
  %v2456 = vpack.c.b16 %v2344, %v2343
  %v2457 = vpack.c.b16 %v2346, %v2345
  %v2458 = vpack.c.b16 %v2348, %v2347
  %v2459 = vpack.c.b16 %v2350, %v2349
  %v2460 = vpack.c.b16 %v2352, %v2351
  %v2461 = vpack.c.b16 %v2354, %v2353
  %v2462 = vpack.c.b16 %v2356, %v2355
  %v2463 = vpack.c.b16 %v2358, %v2357
  %v2464 = vpack.c.b16 %v2360, %v2359
  %v2465 = vpack.c.b16 %v2362, %v2361
  %v2466 = vpack.c.b16 %v2364, %v2363
  %v2467 = vpack.c.b16 %v2366, %v2365
  %v2468 = vpack.c.b16 %v2368, %v2367
  %v2469 = vpack.c.b16 %v2370, %v2369
  %v2470 = vpack.c.b16 %v2372, %v2371
  %v2471 = vpack.c.b16 %v2374, %v2373
  %v2472 = vpack.c.b16 %v2376, %v2375
  %v2473 = vpack.c.b16 %v2378, %v2377
  %v2474 = vpack.c.b16 %v2380, %v2379
  %v2475 = vpack.c.b16 %v2382, %v2381
  %v2476 = vpack.c.b16 %v2384, %v2383
  %v2477 = vpack.c.b16 %v2386, %v2385
  %v2478 = vpack.c.b16 %v2388, %v2387
  %v2479 = vpack.c.b16 %v2390, %v2389
  %v2480 = vpack.c.b16 %v2392, %v2391
  %v2481 = vpack.c.b16 %v2394, %v2393
  %v2482 = vpack.c.b16 %v2396, %v2395
  %v2483 = vpack.c.b16 %v2398, %v2397
  %v2484 = vpack.c.b16 %v2400, %v2399
  %v2485 = vpack.c.b16 %v2402, %v2401
  %v2486 = vpack.c.b16 %v2404, %v2403
  %v2487 = vpack.c.b16 %v2406, %v2405
  %v2488 = vpack.c.b16 %v2408, %v2407
  %v2489 = vpack.c.b16 %v2410, %v2409
  %v2490 = vpack.c.b16 %v2412, %v2411
  %v2491 = vpack.c.b16 %v2414, %v2413
  %v2492 = vpack.c.b16 %v2416, %v2415
  %v2493 = vpack.c.b16 %v2418, %v2417
  %v2494 = vpack.c.b16 %v2420, %v2419
  %v2495 = vpack.c.b16 %v2422, %v2421
  %v2496 = vpack.c.b16 %v2424, %v2423
  %v2497 = vpack.c.b16 %v2426, %v2425
  %v2498 = vpack.c.b16 %v2428, %v2427
  %v2499 = vpack.c.b16 %v2430, %v2429
  %v2500 = vpack.c.b16 %v2432, %v2431
  %v2501 = vpack.c.b16 %v2434, %v2433
  %v2502 = vpack.c.b16 %v2436, %v2435
  %v2503 = vpack.c.b16 %v2438, %v2437
  %v2504 = vpack.c.b16 %v2440, %v2439
  %2569 = vmatpush.bf16.msra.mxu0 %v2448
  %2570 = vmatpush.bf16.msra.mxu0 %v2447
  %2571 = vmatpush.bf16.msra.mxu0 %v2446
  %2572 = vmatpush.bf16.msra.mxu0 %v2445
  %2573 = vmatpush.bf16.msra.mxu0 %v2444
  %2574 = vmatpush.bf16.msra.mxu0 %v2443
  %2575 = vmatpush.bf16.msra.mxu0 %v2442
  %2576 = vmatpush.bf16.msra.mxu0 %v2441
  %2577 = vmatmul.bf16.gmra.mxu0 %v2048
  %v2578 = vpop.f32.mrf.mxu0
  %v2579 = vadd.f32 %v2184, %v2578
  %v2580 = vpop.f32.mrf.mxu0
  %2581 = vdwg.mxu0
  %2582 = vmatpush.bf16.msra.mxu0 %v2456
  %2583 = vmatpush.bf16.msra.mxu0 %v2455
  %2584 = vmatpush.bf16.msra.mxu0 %v2454
  %2585 = vmatpush.bf16.msra.mxu0 %v2453
  %2586 = vmatpush.bf16.msra.mxu0 %v2452
  %2587 = vmatpush.bf16.msra.mxu0 %v2451
  %2588 = vmatpush.bf16.msra.mxu0 %v2450
  %2589 = vmatpush.bf16.msra.mxu0 %v2449
  %2590 = vmatmul.bf16.gmra.mxu0 %v2049
  %v2591 = vpop.f32.mrf.mxu0
  %v2592 = vadd.f32 %v2579, %v2591
  %v2593 = vpop.f32.mrf.mxu0
  %2594 = vdwg.mxu0
  %2595 = vmatpush.bf16.msra.mxu0 %v2464
  %2596 = vmatpush.bf16.msra.mxu0 %v2463
  %2597 = vmatpush.bf16.msra.mxu0 %v2462
  %2598 = vmatpush.bf16.msra.mxu0 %v2461
  %2599 = vmatpush.bf16.msra.mxu0 %v2460
  %2600 = vmatpush.bf16.msra.mxu0 %v2459
  %2601 = vmatpush.bf16.msra.mxu0 %v2458
  %2602 = vmatpush.bf16.msra.mxu0 %v2457
  %2603 = vmatmul.bf16.gmra.mxu0 %v2050
  %v2604 = vpop.f32.mrf.mxu0
  %v2605 = vadd.f32 %v2592, %v2604
  %v2606 = vpop.f32.mrf.mxu0
  %2607 = vdwg.mxu0
  %2608 = vmatpush.bf16.msra.mxu0 %v2472
  %2609 = vmatpush.bf16.msra.mxu0 %v2471
  %2610 = vmatpush.bf16.msra.mxu0 %v2470
  %2611 = vmatpush.bf16.msra.mxu0 %v2469
  %2612 = vmatpush.bf16.msra.mxu0 %v2468
  %2613 = vmatpush.bf16.msra.mxu0 %v2467
  %2614 = vmatpush.bf16.msra.mxu0 %v2466
  %2615 = vmatpush.bf16.msra.mxu0 %v2465
  %2616 = vmatmul.bf16.gmra.mxu0 %v2051
  %v2617 = vpop.f32.mrf.mxu0
  %v2618 = vadd.f32 %v2605, %v2617
  %v2619 = vpop.f32.mrf.mxu0
  %2620 = vdwg.mxu0
  %2621 = vmatpush.bf16.msra.mxu0 %v2480
  %2622 = vmatpush.bf16.msra.mxu0 %v2479
  %2623 = vmatpush.bf16.msra.mxu0 %v2478
  %2624 = vmatpush.bf16.msra.mxu0 %v2477
  %2625 = vmatpush.bf16.msra.mxu0 %v2476
  %2626 = vmatpush.bf16.msra.mxu0 %v2475
  %2627 = vmatpush.bf16.msra.mxu0 %v2474
  %2628 = vmatpush.bf16.msra.mxu0 %v2473
  %2629 = vmatmul.bf16.gmra.mxu0 %v2052
  %v2630 = vpop.f32.mrf.mxu0
  %v2631 = vadd.f32 %v2618, %v2630
  %v2632 = vpop.f32.mrf.mxu0
  %2633 = vdwg.mxu0
  %2634 = vmatpush.bf16.msra.mxu0 %v2488
  %2635 = vmatpush.bf16.msra.mxu0 %v2487
  %2636 = vmatpush.bf16.msra.mxu0 %v2486
  %2637 = vmatpush.bf16.msra.mxu0 %v2485
  %2638 = vmatpush.bf16.msra.mxu0 %v2484
  %2639 = vmatpush.bf16.msra.mxu0 %v2483
  %2640 = vmatpush.bf16.msra.mxu0 %v2482
  %2641 = vmatpush.bf16.msra.mxu0 %v2481
  %2642 = vmatmul.bf16.gmra.mxu0 %v2053
  %v2643 = vpop.f32.mrf.mxu0
  %v2644 = vadd.f32 %v2631, %v2643
  %v2645 = vpop.f32.mrf.mxu0
  %2646 = vdwg.mxu0
  %2647 = vmatpush.bf16.msra.mxu0 %v2496
  %2648 = vmatpush.bf16.msra.mxu0 %v2495
  %2649 = vmatpush.bf16.msra.mxu0 %v2494
  %2650 = vmatpush.bf16.msra.mxu0 %v2493
  %2651 = vmatpush.bf16.msra.mxu0 %v2492
  %2652 = vmatpush.bf16.msra.mxu0 %v2491
  %2653 = vmatpush.bf16.msra.mxu0 %v2490
  %2654 = vmatpush.bf16.msra.mxu0 %v2489
  %2655 = vmatmul.bf16.gmra.mxu0 %v2054
  %v2656 = vpop.f32.mrf.mxu0
  %v2657 = vadd.f32 %v2644, %v2656
  %v2658 = vpop.f32.mrf.mxu0
  %2659 = vdwg.mxu0
  %2660 = vmatpush.bf16.msra.mxu0 %v2504
  %2661 = vmatpush.bf16.msra.mxu0 %v2503
  %2662 = vmatpush.bf16.msra.mxu0 %v2502
  %2663 = vmatpush.bf16.msra.mxu0 %v2501
  %2664 = vmatpush.bf16.msra.mxu0 %v2500
  %2665 = vmatpush.bf16.msra.mxu0 %v2499
  %2666 = vmatpush.bf16.msra.mxu0 %v2498
  %2667 = vmatpush.bf16.msra.mxu0 %v2497
  %2668 = vmatmul.bf16.gmra.mxu0 %v2055
  %v2669 = vpop.f32.mrf.mxu0
  %v2670 = vadd.f32 %v2657, %v2669
  %v2671 = vpop.f32.mrf.mxu0
  %2672 = vdwg.mxu0
  %v2673 = vmax.f32 %v2670, 0.0
  %v2674 = vpack.c.bf16 %v2673, %v2673
  %v2675 = vld [vmem:[%s2 + $0x700] sm:$0xf]
  %v2676 = vld [vmem:[%s2 + $0x708] sm:$0xf]
  %v2677 = vld [vmem:[%s2 + $0x710] sm:$0xf]
  %v2678 = vld [vmem:[%s2 + $0x718] sm:$0xf]
  %v2679 = vld [vmem:[%s2 + $0x720] sm:$0xf]
  %v2680 = vld [vmem:[%s2 + $0x728] sm:$0xf]
  %v2681 = vld [vmem:[%s2 + $0x730] sm:$0xf]
  %v2682 = vld [vmem:[%s2 + $0x738] sm:$0xf]
  %v2683 = vld [vmem:[%s1 + $0x14] ss:$0 sm:$0xff]
  %v2692 = vunpack.c.l.b16 %v2675
  %v2693 = vunpack.c.l.b16 %v2676
  %v2694 = vunpack.c.l.b16 %v2677
  %v2695 = vunpack.c.l.b16 %v2678
  %v2696 = vunpack.c.l.b16 %v2679
  %v2697 = vunpack.c.l.b16 %v2680
  %v2698 = vunpack.c.l.b16 %v2681
  %v2699 = vunpack.c.l.b16 %v2682
  %v2700 = vpack.c.b16 %v2693, %v2692
  %v2701 = vpack.c.b16 %v2695, %v2694
  %v2702 = vpack.c.b16 %v2697, %v2696
  %v2703 = vpack.c.b16 %v2699, %v2698
  %vm2708 = vcmask 523264
  %v2710 = vsel %vm2708, %v2674, 0
  %2712 = vmatpush.bf16.msra.mxu0 0
  %2713 = vmatpush.bf16.msra.mxu0 0
  %2714 = vmatpush.bf16.msra.mxu0 0
  %2715 = vmatpush.bf16.msra.mxu0 0
  %2716 = vmatpush.bf16.msra.mxu0 %v2703
  %2717 = vmatpush.bf16.msra.mxu0 %v2702
  %2718 = vmatpush.bf16.msra.mxu0 %v2701
  %2719 = vmatpush.bf16.msra.mxu0 %v2700
  %2720 = vmatmul.bf16.gmra.mxu0 %v2710
  %v2721 = vpop.f32.mrf.mxu0
  %v2722 = vadd.f32 %v2683, %v2721
  %v2723 = vpop.f32.mrf.mxu0
  %2724 = vdwg.mxu0
  %2725 = vst [vmem:[%s3] sm:$0xff] %v2722
  // Predicated region
  $region14: #{simple_cnn_forward.1} parent=0 // pred_check
    _
  $region15: #{simple_cnn_forward.1} parent=0 // pred_check_branch
    %2727 = sbr.rel (0) target = $region17
  $region16: #{simple_cnn_forward.1} parent=0 // pred_region
    _
  $region17: #{simple_cnn_forward.1} parent=0 // pred_fallthru
    _
  // Predicated region
  $region18: #{simple_cnn_forward.1} parent=0 // pred_check
    _
  $region19: #{simple_cnn_forward.1} parent=0 // pred_check_branch
    %2729 = sbr.rel (0) target = $region21
  $region20: #{simple_cnn_forward.1} parent=0 // pred_region
    _
  $region21: #{simple_cnn_forward.1} parent=0 // pred_fallthru
    _

</llo_original>
